<compile_context>
chip_gen: v5e
topology: v5e:2x2
jax: 0.10.0
libtpu: 0.0.40
codegen_flags: <defaults>
</compile_context>

<pallas_src>
import functools

import jax
import jax.numpy as jnp
from jax.experimental import pallas as pl
from jax.experimental.pallas import tpu as pltpu

LN_EPS = 1e-5  # torch.nn.LayerNorm default


def _gelu(x):
    # tanh-approx GELU: transcendental goes to the EUP slot (review item).
    # torch nn.GELU() default is exact erf; deviation ~1e-3, covered by tolerance.
    return jax.nn.gelu(x, approximate=True)


def _gelu_exact(x):
    # exact erf form (torch semantics) — used by the pure-JAX reference only.
    return jax.nn.gelu(x, approximate=False)


def _layernorm(x, g, b):
    mu = jnp.mean(x, axis=-1, keepdims=True)
    var = jnp.mean((x - mu) ** 2, axis=-1, keepdims=True)
    return (x - mu) * jax.lax.rsqrt(var + LN_EPS) * g + b


def situation_kernel(bt, T, D,
                     fs_ref, w0_ref, b0_ref,
                     ln1g_ref, ln1b_ref, tw1_ref, tb1_ref, tw2_ref, tb2_ref,
                     ln2g_ref, ln2b_ref, cw1_ref, cb1_ref, cw2_ref, cb2_ref,
                     out_ref):
    """One grid step = one mixer block (axis 1, 'arbitrary') on one batch tile
    (axis 0, 'parallel').  Residual h lives in the resident output block."""
    f32 = jnp.float32
    bf16 = jnp.bfloat16
    nb = pl.program_id(1)

    # ---- matrix_line_affine only on the first mixer-block step ----
    @pl.when(nb == 0)
    def _():
        x = fs_ref[...]                                           # (bt*T, L) f32
        out_ref[...] = (jnp.dot(x.astype(bf16), w0_ref[...],
                                preferred_element_type=f32) + b0_ref[...])

    h = out_ref[...]                                              # (bt*T, D) f32 residual

    # per-block params: read once per grid step (leading block dim of size 1)
    ln1g = ln1g_ref[0]; ln1b = ln1b_ref[0]                        # (1, D)  f32
    ln2g = ln2g_ref[0]; ln2b = ln2b_ref[0]                        # (1, D)  f32
    tw1 = tw1_ref[0]; tb1 = tb1_ref[0]                            # (Ht, T) bf16, (Ht, 1) f32
    tw2 = tw2_ref[0]; tb2 = tb2_ref[0]                            # (T, Ht) bf16, (T, 1) f32
    cw1 = cw1_ref[0]; cb1 = cb1_ref[0]                            # (D, Hc) bf16, (1, Hc) f32
    cw2 = cw2_ref[0]; cb2 = cb2_ref[0]                            # (Hc, D) bf16, (1, D) f32

    # ---- token mixing: LN over features, MLP over tokens ----
    y = _layernorm(h, ln1g, ln1b)                                 # (bt*T, D) f32
    y3 = y.reshape(bt, T, D).astype(bf16)                         # leading-dim split only
    # torch computes on y^T (D, T); equivalently left-multiply by torch weights.
    # Per-sample 2-D matmuls (no weight broadcast / batched einsum); static unroll.
    parts = []
    for b in range(bt):
        yb = y3[b]                                                # (T, D) bf16
        u = jnp.dot(tw1, yb, preferred_element_type=f32) + tb1    # (Ht, D) f32
        u = _gelu(u).astype(bf16)
        vb = jnp.dot(tw2, u, preferred_element_type=f32) + tb2    # (T, D) f32
        parts.append(vb)
    v = parts[0] if bt == 1 else jnp.concatenate(parts, axis=0)   # (bt*T, D) f32
    h = h + v

    # ---- channel mixing: LN over features, MLP over features (M = bt*T rows) ----
    z = _layernorm(h, ln2g, ln2b)                                 # (bt*T, D) f32
    c = jnp.dot(z.astype(bf16), cw1, preferred_element_type=f32) + cb1   # (bt*T, Hc)
    c = _gelu(c).astype(bf16)
    c = jnp.dot(c, cw2, preferred_element_type=f32) + cb2         # (bt*T, D)

    out_ref[...] = h + c                                          # resident; HBM writeback
                                                                  # happens when the batch
                                                                  # tile index advances.


def _is_dual_tensorcore():
    """True on chips whose two TensorCores are fed via the 'parallel' grid axis
    (v4/v5p megacore, v7x).  v5e/v6e have a single TC per chip."""
    try:
        kind = jax.devices()[0].device_kind.lower()
    except Exception:
        return False
    return any(t in kind for t in ("v4", "v5p", "v7", "tpu7"))


def _pick_batch_block(B, T, dual_tc, max_rows=2048):
    """Largest batch tile that fits; require >=2 grid steps only on dual-TC chips."""
    divs = [d for d in range(1, B + 1) if B % d == 0]
    cands = ([d for d in divs if B // d >= 2] or divs) if dual_tc else divs
    fitting = [d for d in cands if d * T <= max_rows]
    return max(fitting) if fitting else min(cands)


def situation_network(flowsheet, params, *, num_blocks, batch_block=None):
    """flowsheet: (B, T, L) f32.  Returns transformed_flowsheet (B, T, D) f32."""
    B, T, L = flowsheet.shape
    D = params["w0"].shape[1]
    dual_tc = _is_dual_tensorcore()
    bt = batch_block if batch_block is not None else _pick_batch_block(B, T, dual_tc)
    assert B % bt == 0, "batch tile must divide batch"
    rows = bt * T

    f32, bf16 = jnp.float32, jnp.bfloat16
    # Pre-cast matmul weights to bf16 (MXU-native); biases & LN params stay f32.
    prepared = {
        "w0": params["w0"].astype(bf16), "b0": params["b0"].astype(f32),
        "ln1g": params["ln1g"].astype(f32), "ln1b": params["ln1b"].astype(f32),
        "tw1": params["tw1"].astype(bf16), "tb1": params["tb1"].astype(f32),
        "tw2": params["tw2"].astype(bf16), "tb2": params["tb2"].astype(f32),
        "ln2g": params["ln2g"].astype(f32), "ln2b": params["ln2b"].astype(f32),
        "cw1": params["cw1"].astype(bf16), "cb1": params["cb1"].astype(f32),
        "cw2": params["cw2"].astype(bf16), "cb2": params["cb2"].astype(f32),
    }
    const_names = ("w0", "b0")                       # constant across the whole grid
    block_names = ("ln1g", "ln1b", "tw1", "tb1", "tw2", "tb2",
                   "ln2g", "ln2b", "cw1", "cb1", "cw2", "cb2")  # streamed per mixer block
    ordered = [prepared[k] for k in const_names + block_names]

    fs2d = flowsheet.reshape(B * T, L).astype(f32)   # free XLA reshape in the wrapper

    def const_spec(a):
        n = a.ndim
        return pl.BlockSpec(a.shape, lambda i, nb, _n=n: (0,) * _n)

    def per_block_spec(a):
        # a: (NB, X, Y) stacked per-block tensor -> one block per inner grid step.
        return pl.BlockSpec((1,) + a.shape[1:], lambda i, nb: (nb, 0, 0))

    in_specs = ([pl.BlockSpec((rows, L), lambda i, nb: (i, 0))]
                + [const_spec(prepared[k]) for k in const_names]
                + [per_block_spec(prepared[k]) for k in block_names])

    # vmem_limit derived from actual buffer sizes (review item); per-gen ceiling.
    def _nbytes(a):
        return int(a.size) * a.dtype.itemsize
    const_bytes = sum(_nbytes(prepared[k]) for k in const_names)
    per_block_bytes = sum(_nbytes(prepared[k]) // num_blocks for k in block_names)
    in_tile = rows * L * 4
    out_tile = rows * D * 4
    needed = 2 * (in_tile + out_tile + per_block_bytes) + const_bytes
    # v7x: ~64 MiB per-TC physical VMEM; v5e/v6e: 128 MiB.
    ceiling = (48 << 20) if dual_tc else (100 << 20)
    vmem_limit = int(min(max(2 * needed, 32 << 20), ceiling))

    out2d = pl.pallas_call(
        functools.partial(situation_kernel, bt, T, D),
        out_shape=jax.ShapeDtypeStruct((B * T, D), f32),
        grid_spec=pltpu.PrefetchScalarGridSpec(
            num_scalar_prefetch=0,
            grid=(B // bt, num_blocks),        # batch tiles (parallel) x mixer blocks (arbitrary)
            in_specs=in_specs,
            out_specs=pl.BlockSpec((rows, D), lambda i, nb: (i, 0)),
        ),
        compiler_params=pltpu.CompilerParams(
            dimension_semantics=("parallel", "arbitrary"),
            vmem_limit_bytes=vmem_limit,
        ),
    )(fs2d, *ordered)
    return out2d.reshape(B, T, D)


# ---------------- pure-JAX f32 reference (torch semantics, for correctness) ----------------
def reference(fs, p, num_blocks):
    h = jnp.einsum("btl,ld->btd", fs, p["w0"]) + p["b0"]
    for nb in range(num_blocks):
        y = _layernorm(h, p["ln1g"][nb], p["ln1b"][nb])
        u = _gelu_exact(jnp.einsum("ht,btd->bhd", p["tw1"][nb], y) + p["tb1"][nb])
        v = jnp.einsum("th,bhd->btd", p["tw2"][nb], u) + p["tb2"][nb]
        h = h + v
        z = _layernorm(h, p["ln2g"][nb], p["ln2b"][nb])
        c = _gelu_exact(jnp.einsum("btd,dh->bth", z, p["cw1"][nb]) + p["cb1"][nb])
        c = jnp.einsum("bth,hd->btd", c, p["cw2"][nb]) + p["cb2"][nb]
        h = h + c
    return h


def make_params(key, *, T, L, D, Ht, Hc, NB):
    def u(k, shape, fan_in):
        bound = 1.0 / jnp.sqrt(jnp.float32(fan_in))
        return jax.random.uniform(k, shape, jnp.float32, -bound, bound)

    ks = list(jax.random.split(key, 2 + NB * 8))
    p = {
        "w0": u(ks[0], (L, D), L),
        "b0": u(ks[1], (1, D), L),
        "ln1g": jnp.ones((NB, 1, D), jnp.float32),
        "ln1b": jnp.zeros((NB, 1, D), jnp.float32),
        "ln2g": jnp.ones((NB, 1, D), jnp.float32),
        "ln2b": jnp.zeros((NB, 1, D), jnp.float32),
    }
    tw1, tb1, tw2, tb2, cw1, cb1, cw2, cb2 = [], [], [], [], [], [], [], []
    for nb in range(NB):
        o = 2 + nb * 8
        tw1.append(u(ks[o + 0], (Ht, T), T))    # torch Linear(T, Ht).weight
        tb1.append(u(ks[o + 1], (Ht, 1), T))
        tw2.append(u(ks[o + 2], (T, Ht), Ht))   # torch Linear(Ht, T).weight
        tb2.append(u(ks[o + 3], (T, 1), Ht))
        cw1.append(u(ks[o + 4], (D, Hc), D))    # torch Linear(D, Hc).weight.T
        cb1.append(u(ks[o + 5], (1, Hc), D))
        cw2.append(u(ks[o + 6], (Hc, D), Hc))   # torch Linear(Hc, D).weight.T
        cb2.append(u(ks[o + 7], (1, D), Hc))
    p.update(
        tw1=jnp.stack(tw1), tb1=jnp.stack(tb1), tw2=jnp.stack(tw2), tb2=jnp.stack(tb2),
        cw1=jnp.stack(cw1), cb1=jnp.stack(cb1), cw2=jnp.stack(cw2), cb2=jnp.stack(cb2),
    )
    return p


if __name__ == "__main__":
    # small, module-consistent shapes (B=8 exercises the batch-fold; grid has
    # >=1 batch step x NB mixer-block steps)
    B = 8           # batch
    T = 8           # env_config.num_lines_flowsheet_matrix (tokens)
    L = 16          # env_config.line_length_flowsheet_matrix (features per line)
    D = 32          # latent_dimension
    EF, ET = 2, 2   # expansion_factor_feature_mixing / _token_mixing
    NB = 2          # num_mixer_blocks
    Hc, Ht = D * EF, T * ET

    key = jax.random.PRNGKey(0)
    k_in, k_par = jax.random.split(key)
    flowsheet = jax.random.normal(k_in, (B, T, L), jnp.float32)
    params = make_params(k_par, T=T, L=L, D=D, Ht=Ht, Hc=Hc, NB=NB)

    transformed = situation_network(flowsheet, params, num_blocks=NB)
    transformed = jax.block_until_ready(transformed)
    situation_vector = None  # return_situation_vec=False path

    ref = reference(flowsheet, params, NB)
    assert transformed.shape == (B, T, D)
    max_err = float(jnp.max(jnp.abs(transformed - ref)))
    # bf16 matmul operands + tanh GELU vs. f32/erf torch-style reference -> relaxed tolerance
    assert jnp.allclose(transformed, ref, atol=5e-2, rtol=5e-2), \
        f"mismatch vs reference (max abs err {max_err})"

    print("KERNEL_OK")
</pallas_src>

<mosaic_0001>
module attributes {stable_mosaic.version = 11 : i64} {
  func.func @situation_kernel(%arg0: i32, %arg1: i32, %arg2: memref<64x16xf32, #tpu.memory_space<vmem>>, %arg3: memref<16x32xbf16, #tpu.memory_space<vmem>>, %arg4: memref<1x32xf32, #tpu.memory_space<vmem>>, %arg5: memref<1x1x32xf32, #tpu.memory_space<vmem>>, %arg6: memref<1x1x32xf32, #tpu.memory_space<vmem>>, %arg7: memref<1x16x8xbf16, #tpu.memory_space<vmem>>, %arg8: memref<1x16x1xf32, #tpu.memory_space<vmem>>, %arg9: memref<1x8x16xbf16, #tpu.memory_space<vmem>>, %arg10: memref<1x8x1xf32, #tpu.memory_space<vmem>>, %arg11: memref<1x1x32xf32, #tpu.memory_space<vmem>>, %arg12: memref<1x1x32xf32, #tpu.memory_space<vmem>>, %arg13: memref<1x32x64xbf16, #tpu.memory_space<vmem>>, %arg14: memref<1x1x64xf32, #tpu.memory_space<vmem>>, %arg15: memref<1x64x32xbf16, #tpu.memory_space<vmem>>, %arg16: memref<1x1x32xf32, #tpu.memory_space<vmem>>, %arg17: memref<64x32xf32, #tpu.memory_space<vmem>>) attributes {dimension_semantics = [#tpu.dimension_semantics<parallel>, #tpu.dimension_semantics<arbitrary>], iteration_bounds = array<i64: 1, 2>, scalar_prefetch = 0 : i64, scratch_operands = 0 : i64, tpu.core_type = #tpu.core_type<tc>, window_params = [{transform_indices = @transform_0, window_bounds = array<i64: 64, 16>}, {pipeline_mode = #tpu.pipeline_mode<synchronous>, transform_indices = @transform_1, window_bounds = array<i64: 16, 32>}, {pipeline_mode = #tpu.pipeline_mode<synchronous>, transform_indices = @transform_2, window_bounds = array<i64: 1, 32>}, {transform_indices = @transform_3, window_bounds = array<i64: 1, 1, 32>}, {transform_indices = @transform_4, window_bounds = array<i64: 1, 1, 32>}, {transform_indices = @transform_5, window_bounds = array<i64: 1, 16, 8>}, {transform_indices = @transform_6, window_bounds = array<i64: 1, 16, 1>}, {transform_indices = @transform_7, window_bounds = array<i64: 1, 8, 16>}, {transform_indices = @transform_8, window_bounds = array<i64: 1, 8, 1>}, {transform_indices = @transform_9, window_bounds = array<i64: 1, 1, 32>}, {transform_indices = @transform_10, window_bounds = array<i64: 1, 1, 32>}, {transform_indices = @transform_11, window_bounds = array<i64: 1, 32, 64>}, {transform_indices = @transform_12, window_bounds = array<i64: 1, 1, 64>}, {transform_indices = @transform_13, window_bounds = array<i64: 1, 64, 32>}, {transform_indices = @transform_14, window_bounds = array<i64: 1, 1, 32>}, {transform_indices = @transform_15, window_bounds = array<i64: 64, 32>}]} {
    %c0_i32 = arith.constant 0 : i32
    %0 = arith.cmpi eq, %arg1, %c0_i32 : i32
    %1 = arith.extui %0 : i1 to i32
    %c0_i32_0 = arith.constant 0 : i32
    %2 = arith.cmpi ne, %1, %c0_i32_0 : i32
    scf.if %2 {
      %c0_103 = arith.constant 0 : index
      %c0_104 = arith.constant 0 : index
      %275 = vector.load %arg2[%c0_103, %c0_104] : memref<64x16xf32, #tpu.memory_space<vmem>>, vector<64x16xf32>
      %276 = arith.truncf %275 : vector<64x16xf32> to vector<64x16xbf16>
      %c0_105 = arith.constant 0 : index
      %c0_106 = arith.constant 0 : index
      %277 = vector.load %arg3[%c0_105, %c0_106] : memref<16x32xbf16, #tpu.memory_space<vmem>>, vector<16x32xbf16>
      %cst_107 = arith.constant dense<0.000000e+00> : vector<64x32xf32>
      %278 = tpu.matmul %276, %277, %cst_107 {dimension_numbers = #tpu.dot_dimension_numbers<[1], [0], [0], [1], [0, 0, 1, 1], [], []>} : vector<64x16xbf16>, vector<16x32xbf16>, vector<64x32xf32> -> vector<64x32xf32>
      %c0_108 = arith.constant 0 : index
      %c0_109 = arith.constant 0 : index
      %279 = vector.load %arg4[%c0_108, %c0_109] : memref<1x32xf32, #tpu.memory_space<vmem>>, vector<1x32xf32>
      %280 = vector.broadcast %279 : vector<1x32xf32> to vector<64x32xf32>
      %281 = arith.addf %278, %280 : vector<64x32xf32>
      %c0_110 = arith.constant 0 : index
      %c0_111 = arith.constant 0 : index
      %282 = vector.load %arg17[%c0_110, %c0_111] : memref<64x32xf32, #tpu.memory_space<vmem>>, vector<64x32xf32>
      tpu.vector_store %arg17[%c0_110, %c0_111], %281 {strides = array<i32>} : memref<64x32xf32, #tpu.memory_space<vmem>>, vector<64x32xf32>,
    } else {
    }
    %c0 = arith.constant 0 : index
    %c0_1 = arith.constant 0 : index
    %3 = vector.load %arg17[%c0, %c0_1] : memref<64x32xf32, #tpu.memory_space<vmem>>, vector<64x32xf32>
    %c0_2 = arith.constant 0 : index
    %c0_3 = arith.constant 0 : index
    %c0_4 = arith.constant 0 : index
    %4 = vector.load %arg5[%c0_2, %c0_3, %c0_4] : memref<1x1x32xf32, #tpu.memory_space<vmem>>, vector<1x1x32xf32>
    %5 = vector.shape_cast %4 : vector<1x1x32xf32> to vector<1x32xf32>
    %c0_5 = arith.constant 0 : index
    %c0_6 = arith.constant 0 : index
    %c0_7 = arith.constant 0 : index
    %6 = vector.load %arg6[%c0_5, %c0_6, %c0_7] : memref<1x1x32xf32, #tpu.memory_space<vmem>>, vector<1x1x32xf32>
    %7 = vector.shape_cast %6 : vector<1x1x32xf32> to vector<1x32xf32>
    %c0_8 = arith.constant 0 : index
    %c0_9 = arith.constant 0 : index
    %c0_10 = arith.constant 0 : index
    %8 = vector.load %arg11[%c0_8, %c0_9, %c0_10] : memref<1x1x32xf32, #tpu.memory_space<vmem>>, vector<1x1x32xf32>
    %9 = vector.shape_cast %8 : vector<1x1x32xf32> to vector<1x32xf32>
    %c0_11 = arith.constant 0 : index
    %c0_12 = arith.constant 0 : index
    %c0_13 = arith.constant 0 : index
    %10 = vector.load %arg12[%c0_11, %c0_12, %c0_13] : memref<1x1x32xf32, #tpu.memory_space<vmem>>, vector<1x1x32xf32>
    %11 = vector.shape_cast %10 : vector<1x1x32xf32> to vector<1x32xf32>
    %c0_14 = arith.constant 0 : index
    %c0_15 = arith.constant 0 : index
    %c0_16 = arith.constant 0 : index
    %12 = vector.load %arg7[%c0_14, %c0_15, %c0_16] : memref<1x16x8xbf16, #tpu.memory_space<vmem>>, vector<1x16x8xbf16>
    %13 = vector.shape_cast %12 : vector<1x16x8xbf16> to vector<16x8xbf16>
    %c0_17 = arith.constant 0 : index
    %c0_18 = arith.constant 0 : index
    %c0_19 = arith.constant 0 : index
    %14 = vector.load %arg8[%c0_17, %c0_18, %c0_19] : memref<1x16x1xf32, #tpu.memory_space<vmem>>, vector<1x16x1xf32>
    %15 = vector.shape_cast %14 : vector<1x16x1xf32> to vector<16x1xf32>
    %c0_20 = arith.constant 0 : index
    %c0_21 = arith.constant 0 : index
    %c0_22 = arith.constant 0 : index
    %16 = vector.load %arg9[%c0_20, %c0_21, %c0_22] : memref<1x8x16xbf16, #tpu.memory_space<vmem>>, vector<1x8x16xbf16>
    %17 = vector.shape_cast %16 : vector<1x8x16xbf16> to vector<8x16xbf16>
    %c0_23 = arith.constant 0 : index
    %c0_24 = arith.constant 0 : index
    %c0_25 = arith.constant 0 : index
    %18 = vector.load %arg10[%c0_23, %c0_24, %c0_25] : memref<1x8x1xf32, #tpu.memory_space<vmem>>, vector<1x8x1xf32>
    %19 = vector.shape_cast %18 : vector<1x8x1xf32> to vector<8x1xf32>
    %c0_26 = arith.constant 0 : index
    %c0_27 = arith.constant 0 : index
    %c0_28 = arith.constant 0 : index
    %20 = vector.load %arg13[%c0_26, %c0_27, %c0_28] : memref<1x32x64xbf16, #tpu.memory_space<vmem>>, vector<1x32x64xbf16>
    %21 = vector.shape_cast %20 : vector<1x32x64xbf16> to vector<32x64xbf16>
    %c0_29 = arith.constant 0 : index
    %c0_30 = arith.constant 0 : index
    %c0_31 = arith.constant 0 : index
    %22 = vector.load %arg14[%c0_29, %c0_30, %c0_31] : memref<1x1x64xf32, #tpu.memory_space<vmem>>, vector<1x1x64xf32>
    %23 = vector.shape_cast %22 : vector<1x1x64xf32> to vector<1x64xf32>
    %c0_32 = arith.constant 0 : index
    %c0_33 = arith.constant 0 : index
    %c0_34 = arith.constant 0 : index
    %24 = vector.load %arg15[%c0_32, %c0_33, %c0_34] : memref<1x64x32xbf16, #tpu.memory_space<vmem>>, vector<1x64x32xbf16>
    %25 = vector.shape_cast %24 : vector<1x64x32xbf16> to vector<64x32xbf16>
    %c0_35 = arith.constant 0 : index
    %c0_36 = arith.constant 0 : index
    %c0_37 = arith.constant 0 : index
    %26 = vector.load %arg16[%c0_35, %c0_36, %c0_37] : memref<1x1x32xf32, #tpu.memory_space<vmem>>, vector<1x1x32xf32>
    %27 = vector.shape_cast %26 : vector<1x1x32xf32> to vector<1x32xf32>
    %cst = arith.constant dense<0.000000e+00> : vector<64xf32>
    %28 = vector.multi_reduction <add>, %3, %cst [1] : vector<64x32xf32> to vector<64xf32>
    %29 = vector.shape_cast %28 : vector<64xf32> to vector<64x1xf32>
    %cst_38 = arith.constant 3.200000e+01 : f32
    %30 = vector.broadcast %cst_38 : f32 to vector<64x1xf32>
    %31 = arith.divf %29, %30 : vector<64x1xf32>
    %32 = vector.broadcast %31 : vector<64x1xf32> to vector<64x32xf32>
    %33 = arith.subf %3, %32 : vector<64x32xf32>
    %34 = arith.mulf %33, %33 : vector<64x32xf32>
    %cst_39 = arith.constant dense<0.000000e+00> : vector<64xf32>
    %35 = vector.multi_reduction <add>, %34, %cst_39 [1] : vector<64x32xf32> to vector<64xf32>
    %36 = vector.shape_cast %35 : vector<64xf32> to vector<64x1xf32>
    %cst_40 = arith.constant 3.200000e+01 : f32
    %37 = vector.broadcast %cst_40 : f32 to vector<64x1xf32>
    %38 = arith.divf %36, %37 : vector<64x1xf32>
    %39 = vector.broadcast %31 : vector<64x1xf32> to vector<64x32xf32>
    %40 = arith.subf %3, %39 : vector<64x32xf32>
    %cst_41 = arith.constant 9.99999974E-6 : f32
    %41 = vector.broadcast %cst_41 : f32 to vector<64x1xf32>
    %42 = arith.addf %38, %41 : vector<64x1xf32>
    %43 = math.rsqrt %42 : vector<64x1xf32>
    %44 = vector.broadcast %43 : vector<64x1xf32> to vector<64x32xf32>
    %45 = arith.mulf %40, %44 : vector<64x32xf32>
    %46 = vector.broadcast %5 : vector<1x32xf32> to vector<64x32xf32>
    %47 = arith.mulf %45, %46 : vector<64x32xf32>
    %48 = vector.broadcast %7 : vector<1x32xf32> to vector<64x32xf32>
    %49 = arith.addf %47, %48 : vector<64x32xf32>
    %50 = vector.shape_cast %49 : vector<64x32xf32> to vector<8x8x32xf32>
    %51 = arith.truncf %50 : vector<8x8x32xf32> to vector<8x8x32xbf16>
    %52 = vector.extract_strided_slice %51 {offsets = [0, 0, 0], sizes = [1, 8, 32], strides = [1, 1, 1]} : vector<8x8x32xbf16> to vector<1x8x32xbf16>
    %53 = vector.shape_cast %52 : vector<1x8x32xbf16> to vector<8x32xbf16>
    %cst_42 = arith.constant dense<0.000000e+00> : vector<16x32xf32>
    %54 = tpu.matmul %13, %53, %cst_42 {dimension_numbers = #tpu.dot_dimension_numbers<[1], [0], [0], [1], [0, 0, 1, 1], [], []>} : vector<16x8xbf16>, vector<8x32xbf16>, vector<16x32xf32> -> vector<16x32xf32>
    %55 = vector.broadcast %15 : vector<16x1xf32> to vector<16x32xf32>
    %56 = arith.addf %54, %55 : vector<16x32xf32>
    %57 = arith.mulf %56, %56 : vector<16x32xf32>
    %58 = arith.mulf %56, %57 : vector<16x32xf32>
    %cst_43 = arith.constant 4.471500e-02 : f32
    %59 = vector.broadcast %cst_43 : f32 to vector<16x32xf32>
    %60 = arith.mulf %59, %58 : vector<16x32xf32>
    %61 = arith.addf %56, %60 : vector<16x32xf32>
    %cst_44 = arith.constant 0.797884583 : f32
    %62 = vector.broadcast %cst_44 : f32 to vector<16x32xf32>
    %63 = arith.mulf %62, %61 : vector<16x32xf32>
    %64 = math.tanh %63 : vector<16x32xf32>
    %cst_45 = arith.constant 1.000000e+00 : f32
    %65 = vector.broadcast %cst_45 : f32 to vector<16x32xf32>
    %66 = arith.addf %65, %64 : vector<16x32xf32>
    %cst_46 = arith.constant 5.000000e-01 : f32
    %67 = vector.broadcast %cst_46 : f32 to vector<16x32xf32>
    %68 = arith.mulf %67, %66 : vector<16x32xf32>
    %69 = arith.mulf %56, %68 : vector<16x32xf32>
    %70 = arith.truncf %69 : vector<16x32xf32> to vector<16x32xbf16>
    %cst_47 = arith.constant dense<0.000000e+00> : vector<8x32xf32>
    %71 = tpu.matmul %17, %70, %cst_47 {dimension_numbers = #tpu.dot_dimension_numbers<[1], [0], [0], [1], [0, 0, 1, 1], [], []>} : vector<8x16xbf16>, vector<16x32xbf16>, vector<8x32xf32> -> vector<8x32xf32>
    %72 = vector.broadcast %19 : vector<8x1xf32> to vector<8x32xf32>
    %73 = arith.addf %71, %72 : vector<8x32xf32>
    %74 = vector.extract_strided_slice %51 {offsets = [1, 0, 0], sizes = [1, 8, 32], strides = [1, 1, 1]} : vector<8x8x32xbf16> to vector<1x8x32xbf16>
    %75 = vector.shape_cast %74 : vector<1x8x32xbf16> to vector<8x32xbf16>
    %cst_48 = arith.constant dense<0.000000e+00> : vector<16x32xf32>
    %76 = tpu.matmul %13, %75, %cst_48 {dimension_numbers = #tpu.dot_dimension_numbers<[1], [0], [0], [1], [0, 0, 1, 1], [], []>} : vector<16x8xbf16>, vector<8x32xbf16>, vector<16x32xf32> -> vector<16x32xf32>
    %77 = vector.broadcast %15 : vector<16x1xf32> to vector<16x32xf32>
    %78 = arith.addf %76, %77 : vector<16x32xf32>
    %79 = arith.mulf %78, %78 : vector<16x32xf32>
    %80 = arith.mulf %78, %79 : vector<16x32xf32>
    %cst_49 = arith.constant 4.471500e-02 : f32
    %81 = vector.broadcast %cst_49 : f32 to vector<16x32xf32>
    %82 = arith.mulf %81, %80 : vector<16x32xf32>
    %83 = arith.addf %78, %82 : vector<16x32xf32>
    %cst_50 = arith.constant 0.797884583 : f32
    %84 = vector.broadcast %cst_50 : f32 to vector<16x32xf32>
    %85 = arith.mulf %84, %83 : vector<16x32xf32>
    %86 = math.tanh %85 : vector<16x32xf32>
    %cst_51 = arith.constant 1.000000e+00 : f32
    %87 = vector.broadcast %cst_51 : f32 to vector<16x32xf32>
    %88 = arith.addf %87, %86 : vector<16x32xf32>
    %cst_52 = arith.constant 5.000000e-01 : f32
    %89 = vector.broadcast %cst_52 : f32 to vector<16x32xf32>
    %90 = arith.mulf %89, %88 : vector<16x32xf32>
    %91 = arith.mulf %78, %90 : vector<16x32xf32>
    %92 = arith.truncf %91 : vector<16x32xf32> to vector<16x32xbf16>
    %cst_53 = arith.constant dense<0.000000e+00> : vector<8x32xf32>
    %93 = tpu.matmul %17, %92, %cst_53 {dimension_numbers = #tpu.dot_dimension_numbers<[1], [0], [0], [1], [0, 0, 1, 1], [], []>} : vector<8x16xbf16>, vector<16x32xbf16>, vector<8x32xf32> -> vector<8x32xf32>
    %94 = vector.broadcast %19 : vector<8x1xf32> to vector<8x32xf32>
    %95 = arith.addf %93, %94 : vector<8x32xf32>
    %96 = vector.extract_strided_slice %51 {offsets = [2, 0, 0], sizes = [1, 8, 32], strides = [1, 1, 1]} : vector<8x8x32xbf16> to vector<1x8x32xbf16>
    %97 = vector.shape_cast %96 : vector<1x8x32xbf16> to vector<8x32xbf16>
    %cst_54 = arith.constant dense<0.000000e+00> : vector<16x32xf32>
    %98 = tpu.matmul %13, %97, %cst_54 {dimension_numbers = #tpu.dot_dimension_numbers<[1], [0], [0], [1], [0, 0, 1, 1], [], []>} : vector<16x8xbf16>, vector<8x32xbf16>, vector<16x32xf32> -> vector<16x32xf32>
    %99 = vector.broadcast %15 : vector<16x1xf32> to vector<16x32xf32>
    %100 = arith.addf %98, %99 : vector<16x32xf32>
    %101 = arith.mulf %100, %100 : vector<16x32xf32>
    %102 = arith.mulf %100, %101 : vector<16x32xf32>
    %cst_55 = arith.constant 4.471500e-02 : f32
    %103 = vector.broadcast %cst_55 : f32 to vector<16x32xf32>
    %104 = arith.mulf %103, %102 : vector<16x32xf32>
    %105 = arith.addf %100, %104 : vector<16x32xf32>
    %cst_56 = arith.constant 0.797884583 : f32
    %106 = vector.broadcast %cst_56 : f32 to vector<16x32xf32>
    %107 = arith.mulf %106, %105 : vector<16x32xf32>
    %108 = math.tanh %107 : vector<16x32xf32>
    %cst_57 = arith.constant 1.000000e+00 : f32
    %109 = vector.broadcast %cst_57 : f32 to vector<16x32xf32>
    %110 = arith.addf %109, %108 : vector<16x32xf32>
    %cst_58 = arith.constant 5.000000e-01 : f32
    %111 = vector.broadcast %cst_58 : f32 to vector<16x32xf32>
    %112 = arith.mulf %111, %110 : vector<16x32xf32>
    %113 = arith.mulf %100, %112 : vector<16x32xf32>
    %114 = arith.truncf %113 : vector<16x32xf32> to vector<16x32xbf16>
    %cst_59 = arith.constant dense<0.000000e+00> : vector<8x32xf32>
    %115 = tpu.matmul %17, %114, %cst_59 {dimension_numbers = #tpu.dot_dimension_numbers<[1], [0], [0], [1], [0, 0, 1, 1], [], []>} : vector<8x16xbf16>, vector<16x32xbf16>, vector<8x32xf32> -> vector<8x32xf32>
    %116 = vector.broadcast %19 : vector<8x1xf32> to vector<8x32xf32>
    %117 = arith.addf %115, %116 : vector<8x32xf32>
    %118 = vector.extract_strided_slice %51 {offsets = [3, 0, 0], sizes = [1, 8, 32], strides = [1, 1, 1]} : vector<8x8x32xbf16> to vector<1x8x32xbf16>
    %119 = vector.shape_cast %118 : vector<1x8x32xbf16> to vector<8x32xbf16>
    %cst_60 = arith.constant dense<0.000000e+00> : vector<16x32xf32>
    %120 = tpu.matmul %13, %119, %cst_60 {dimension_numbers = #tpu.dot_dimension_numbers<[1], [0], [0], [1], [0, 0, 1, 1], [], []>} : vector<16x8xbf16>, vector<8x32xbf16>, vector<16x32xf32> -> vector<16x32xf32>
    %121 = vector.broadcast %15 : vector<16x1xf32> to vector<16x32xf32>
    %122 = arith.addf %120, %121 : vector<16x32xf32>
    %123 = arith.mulf %122, %122 : vector<16x32xf32>
    %124 = arith.mulf %122, %123 : vector<16x32xf32>
    %cst_61 = arith.constant 4.471500e-02 : f32
    %125 = vector.broadcast %cst_61 : f32 to vector<16x32xf32>
    %126 = arith.mulf %125, %124 : vector<16x32xf32>
    %127 = arith.addf %122, %126 : vector<16x32xf32>
    %cst_62 = arith.constant 0.797884583 : f32
    %128 = vector.broadcast %cst_62 : f32 to vector<16x32xf32>
    %129 = arith.mulf %128, %127 : vector<16x32xf32>
    %130 = math.tanh %129 : vector<16x32xf32>
    %cst_63 = arith.constant 1.000000e+00 : f32
    %131 = vector.broadcast %cst_63 : f32 to vector<16x32xf32>
    %132 = arith.addf %131, %130 : vector<16x32xf32>
    %cst_64 = arith.constant 5.000000e-01 : f32
    %133 = vector.broadcast %cst_64 : f32 to vector<16x32xf32>
    %134 = arith.mulf %133, %132 : vector<16x32xf32>
    %135 = arith.mulf %122, %134 : vector<16x32xf32>
    %136 = arith.truncf %135 : vector<16x32xf32> to vector<16x32xbf16>
    %cst_65 = arith.constant dense<0.000000e+00> : vector<8x32xf32>
    %137 = tpu.matmul %17, %136, %cst_65 {dimension_numbers = #tpu.dot_dimension_numbers<[1], [0], [0], [1], [0, 0, 1, 1], [], []>} : vector<8x16xbf16>, vector<16x32xbf16>, vector<8x32xf32> -> vector<8x32xf32>
    %138 = vector.broadcast %19 : vector<8x1xf32> to vector<8x32xf32>
    %139 = arith.addf %137, %138 : vector<8x32xf32>
    %140 = vector.extract_strided_slice %51 {offsets = [4, 0, 0], sizes = [1, 8, 32], strides = [1, 1, 1]} : vector<8x8x32xbf16> to vector<1x8x32xbf16>
    %141 = vector.shape_cast %140 : vector<1x8x32xbf16> to vector<8x32xbf16>
    %cst_66 = arith.constant dense<0.000000e+00> : vector<16x32xf32>
    %142 = tpu.matmul %13, %141, %cst_66 {dimension_numbers = #tpu.dot_dimension_numbers<[1], [0], [0], [1], [0, 0, 1, 1], [], []>} : vector<16x8xbf16>, vector<8x32xbf16>, vector<16x32xf32> -> vector<16x32xf32>
    %143 = vector.broadcast %15 : vector<16x1xf32> to vector<16x32xf32>
    %144 = arith.addf %142, %143 : vector<16x32xf32>
    %145 = arith.mulf %144, %144 : vector<16x32xf32>
    %146 = arith.mulf %144, %145 : vector<16x32xf32>
    %cst_67 = arith.constant 4.471500e-02 : f32
    %147 = vector.broadcast %cst_67 : f32 to vector<16x32xf32>
    %148 = arith.mulf %147, %146 : vector<16x32xf32>
    %149 = arith.addf %144, %148 : vector<16x32xf32>
    %cst_68 = arith.constant 0.797884583 : f32
    %150 = vector.broadcast %cst_68 : f32 to vector<16x32xf32>
    %151 = arith.mulf %150, %149 : vector<16x32xf32>
    %152 = math.tanh %151 : vector<16x32xf32>
    %cst_69 = arith.constant 1.000000e+00 : f32
    %153 = vector.broadcast %cst_69 : f32 to vector<16x32xf32>
    %154 = arith.addf %153, %152 : vector<16x32xf32>
    %cst_70 = arith.constant 5.000000e-01 : f32
    %155 = vector.broadcast %cst_70 : f32 to vector<16x32xf32>
    %156 = arith.mulf %155, %154 : vector<16x32xf32>
    %157 = arith.mulf %144, %156 : vector<16x32xf32>
    %158 = arith.truncf %157 : vector<16x32xf32> to vector<16x32xbf16>
    %cst_71 = arith.constant dense<0.000000e+00> : vector<8x32xf32>
    %159 = tpu.matmul %17, %158, %cst_71 {dimension_numbers = #tpu.dot_dimension_numbers<[1], [0], [0], [1], [0, 0, 1, 1], [], []>} : vector<8x16xbf16>, vector<16x32xbf16>, vector<8x32xf32> -> vector<8x32xf32>
    %160 = vector.broadcast %19 : vector<8x1xf32> to vector<8x32xf32>
    %161 = arith.addf %159, %160 : vector<8x32xf32>
    %162 = vector.extract_strided_slice %51 {offsets = [5, 0, 0], sizes = [1, 8, 32], strides = [1, 1, 1]} : vector<8x8x32xbf16> to vector<1x8x32xbf16>
    %163 = vector.shape_cast %162 : vector<1x8x32xbf16> to vector<8x32xbf16>
    %cst_72 = arith.constant dense<0.000000e+00> : vector<16x32xf32>
    %164 = tpu.matmul %13, %163, %cst_72 {dimension_numbers = #tpu.dot_dimension_numbers<[1], [0], [0], [1], [0, 0, 1, 1], [], []>} : vector<16x8xbf16>, vector<8x32xbf16>, vector<16x32xf32> -> vector<16x32xf32>
    %165 = vector.broadcast %15 : vector<16x1xf32> to vector<16x32xf32>
    %166 = arith.addf %164, %165 : vector<16x32xf32>
    %167 = arith.mulf %166, %166 : vector<16x32xf32>
    %168 = arith.mulf %166, %167 : vector<16x32xf32>
    %cst_73 = arith.constant 4.471500e-02 : f32
    %169 = vector.broadcast %cst_73 : f32 to vector<16x32xf32>
    %170 = arith.mulf %169, %168 : vector<16x32xf32>
    %171 = arith.addf %166, %170 : vector<16x32xf32>
    %cst_74 = arith.constant 0.797884583 : f32
    %172 = vector.broadcast %cst_74 : f32 to vector<16x32xf32>
    %173 = arith.mulf %172, %171 : vector<16x32xf32>
    %174 = math.tanh %173 : vector<16x32xf32>
    %cst_75 = arith.constant 1.000000e+00 : f32
    %175 = vector.broadcast %cst_75 : f32 to vector<16x32xf32>
    %176 = arith.addf %175, %174 : vector<16x32xf32>
    %cst_76 = arith.constant 5.000000e-01 : f32
    %177 = vector.broadcast %cst_76 : f32 to vector<16x32xf32>
    %178 = arith.mulf %177, %176 : vector<16x32xf32>
    %179 = arith.mulf %166, %178 : vector<16x32xf32>
    %180 = arith.truncf %179 : vector<16x32xf32> to vector<16x32xbf16>
    %cst_77 = arith.constant dense<0.000000e+00> : vector<8x32xf32>
    %181 = tpu.matmul %17, %180, %cst_77 {dimension_numbers = #tpu.dot_dimension_numbers<[1], [0], [0], [1], [0, 0, 1, 1], [], []>} : vector<8x16xbf16>, vector<16x32xbf16>, vector<8x32xf32> -> vector<8x32xf32>
    %182 = vector.broadcast %19 : vector<8x1xf32> to vector<8x32xf32>
    %183 = arith.addf %181, %182 : vector<8x32xf32>
    %184 = vector.extract_strided_slice %51 {offsets = [6, 0, 0], sizes = [1, 8, 32], strides = [1, 1, 1]} : vector<8x8x32xbf16> to vector<1x8x32xbf16>
    %185 = vector.shape_cast %184 : vector<1x8x32xbf16> to vector<8x32xbf16>
    %cst_78 = arith.constant dense<0.000000e+00> : vector<16x32xf32>
    %186 = tpu.matmul %13, %185, %cst_78 {dimension_numbers = #tpu.dot_dimension_numbers<[1], [0], [0], [1], [0, 0, 1, 1], [], []>} : vector<16x8xbf16>, vector<8x32xbf16>, vector<16x32xf32> -> vector<16x32xf32>
    %187 = vector.broadcast %15 : vector<16x1xf32> to vector<16x32xf32>
    %188 = arith.addf %186, %187 : vector<16x32xf32>
    %189 = arith.mulf %188, %188 : vector<16x32xf32>
    %190 = arith.mulf %188, %189 : vector<16x32xf32>
    %cst_79 = arith.constant 4.471500e-02 : f32
    %191 = vector.broadcast %cst_79 : f32 to vector<16x32xf32>
    %192 = arith.mulf %191, %190 : vector<16x32xf32>
    %193 = arith.addf %188, %192 : vector<16x32xf32>
    %cst_80 = arith.constant 0.797884583 : f32
    %194 = vector.broadcast %cst_80 : f32 to vector<16x32xf32>
    %195 = arith.mulf %194, %193 : vector<16x32xf32>
    %196 = math.tanh %195 : vector<16x32xf32>
    %cst_81 = arith.constant 1.000000e+00 : f32
    %197 = vector.broadcast %cst_81 : f32 to vector<16x32xf32>
    %198 = arith.addf %197, %196 : vector<16x32xf32>
    %cst_82 = arith.constant 5.000000e-01 : f32
    %199 = vector.broadcast %cst_82 : f32 to vector<16x32xf32>
    %200 = arith.mulf %199, %198 : vector<16x32xf32>
    %201 = arith.mulf %188, %200 : vector<16x32xf32>
    %202 = arith.truncf %201 : vector<16x32xf32> to vector<16x32xbf16>
    %cst_83 = arith.constant dense<0.000000e+00> : vector<8x32xf32>
    %203 = tpu.matmul %17, %202, %cst_83 {dimension_numbers = #tpu.dot_dimension_numbers<[1], [0], [0], [1], [0, 0, 1, 1], [], []>} : vector<8x16xbf16>, vector<16x32xbf16>, vector<8x32xf32> -> vector<8x32xf32>
    %204 = vector.broadcast %19 : vector<8x1xf32> to vector<8x32xf32>
    %205 = arith.addf %203, %204 : vector<8x32xf32>
    %206 = vector.extract_strided_slice %51 {offsets = [7, 0, 0], sizes = [1, 8, 32], strides = [1, 1, 1]} : vector<8x8x32xbf16> to vector<1x8x32xbf16>
    %207 = vector.shape_cast %206 : vector<1x8x32xbf16> to vector<8x32xbf16>
    %cst_84 = arith.constant dense<0.000000e+00> : vector<16x32xf32>
    %208 = tpu.matmul %13, %207, %cst_84 {dimension_numbers = #tpu.dot_dimension_numbers<[1], [0], [0], [1], [0, 0, 1, 1], [], []>} : vector<16x8xbf16>, vector<8x32xbf16>, vector<16x32xf32> -> vector<16x32xf32>
    %209 = vector.broadcast %15 : vector<16x1xf32> to vector<16x32xf32>
    %210 = arith.addf %208, %209 : vector<16x32xf32>
    %211 = arith.mulf %210, %210 : vector<16x32xf32>
    %212 = arith.mulf %210, %211 : vector<16x32xf32>
    %cst_85 = arith.constant 4.471500e-02 : f32
    %213 = vector.broadcast %cst_85 : f32 to vector<16x32xf32>
    %214 = arith.mulf %213, %212 : vector<16x32xf32>
    %215 = arith.addf %210, %214 : vector<16x32xf32>
    %cst_86 = arith.constant 0.797884583 : f32
    %216 = vector.broadcast %cst_86 : f32 to vector<16x32xf32>
    %217 = arith.mulf %216, %215 : vector<16x32xf32>
    %218 = math.tanh %217 : vector<16x32xf32>
    %cst_87 = arith.constant 1.000000e+00 : f32
    %219 = vector.broadcast %cst_87 : f32 to vector<16x32xf32>
    %220 = arith.addf %219, %218 : vector<16x32xf32>
    %cst_88 = arith.constant 5.000000e-01 : f32
    %221 = vector.broadcast %cst_88 : f32 to vector<16x32xf32>
    %222 = arith.mulf %221, %220 : vector<16x32xf32>
    %223 = arith.mulf %210, %222 : vector<16x32xf32>
    %224 = arith.truncf %223 : vector<16x32xf32> to vector<16x32xbf16>
    %cst_89 = arith.constant dense<0.000000e+00> : vector<8x32xf32>
    %225 = tpu.matmul %17, %224, %cst_89 {dimension_numbers = #tpu.dot_dimension_numbers<[1], [0], [0], [1], [0, 0, 1, 1], [], []>} : vector<8x16xbf16>, vector<16x32xbf16>, vector<8x32xf32> -> vector<8x32xf32>
    %226 = vector.broadcast %19 : vector<8x1xf32> to vector<8x32xf32>
    %227 = arith.addf %225, %226 : vector<8x32xf32>
    %228 = tpu.concatenate %73, %95, %117, %139, %161, %183, %205, %227 in 0 : vector<8x32xf32>, vector<8x32xf32>, vector<8x32xf32>, vector<8x32xf32>, vector<8x32xf32>, vector<8x32xf32>, vector<8x32xf32>, vector<8x32xf32> -> vector<64x32xf32>
    %229 = arith.addf %3, %228 : vector<64x32xf32>
    %cst_90 = arith.constant dense<0.000000e+00> : vector<64xf32>
    %230 = vector.multi_reduction <add>, %229, %cst_90 [1] : vector<64x32xf32> to vector<64xf32>
    %231 = vector.shape_cast %230 : vector<64xf32> to vector<64x1xf32>
    %cst_91 = arith.constant 3.200000e+01 : f32
    %232 = vector.broadcast %cst_91 : f32 to vector<64x1xf32>
    %233 = arith.divf %231, %232 : vector<64x1xf32>
    %234 = vector.broadcast %233 : vector<64x1xf32> to vector<64x32xf32>
    %235 = arith.subf %229, %234 : vector<64x32xf32>
    %236 = arith.mulf %235, %235 : vector<64x32xf32>
    %cst_92 = arith.constant dense<0.000000e+00> : vector<64xf32>
    %237 = vector.multi_reduction <add>, %236, %cst_92 [1] : vector<64x32xf32> to vector<64xf32>
    %238 = vector.shape_cast %237 : vector<64xf32> to vector<64x1xf32>
    %cst_93 = arith.constant 3.200000e+01 : f32
    %239 = vector.broadcast %cst_93 : f32 to vector<64x1xf32>
    %240 = arith.divf %238, %239 : vector<64x1xf32>
    %241 = vector.broadcast %233 : vector<64x1xf32> to vector<64x32xf32>
    %242 = arith.subf %229, %241 : vector<64x32xf32>
    %cst_94 = arith.constant 9.99999974E-6 : f32
    %243 = vector.broadcast %cst_94 : f32 to vector<64x1xf32>
    %244 = arith.addf %240, %243 : vector<64x1xf32>
    %245 = math.rsqrt %244 : vector<64x1xf32>
    %246 = vector.broadcast %245 : vector<64x1xf32> to vector<64x32xf32>
    %247 = arith.mulf %242, %246 : vector<64x32xf32>
    %248 = vector.broadcast %9 : vector<1x32xf32> to vector<64x32xf32>
    %249 = arith.mulf %247, %248 : vector<64x32xf32>
    %250 = vector.broadcast %11 : vector<1x32xf32> to vector<64x32xf32>
    %251 = arith.addf %249, %250 : vector<64x32xf32>
    %252 = arith.truncf %251 : vector<64x32xf32> to vector<64x32xbf16>
    %cst_95 = arith.constant dense<0.000000e+00> : vector<64x64xf32>
    %253 = tpu.matmul %252, %21, %cst_95 {dimension_numbers = #tpu.dot_dimension_numbers<[1], [0], [0], [1], [0, 0, 1, 1], [], []>} : vector<64x32xbf16>, vector<32x64xbf16>, vector<64x64xf32> -> vector<64x64xf32>
    %254 = vector.broadcast %23 : vector<1x64xf32> to vector<64x64xf32>
    %255 = arith.addf %253, %254 : vector<64x64xf32>
    %256 = arith.mulf %255, %255 : vector<64x64xf32>
    %257 = arith.mulf %255, %256 : vector<64x64xf32>
    %cst_96 = arith.constant 4.471500e-02 : f32
    %258 = vector.broadcast %cst_96 : f32 to vector<64x64xf32>
    %259 = arith.mulf %258, %257 : vector<64x64xf32>
    %260 = arith.addf %255, %259 : vector<64x64xf32>
    %cst_97 = arith.constant 0.797884583 : f32
    %261 = vector.broadcast %cst_97 : f32 to vector<64x64xf32>
    %262 = arith.mulf %261, %260 : vector<64x64xf32>
    %263 = math.tanh %262 : vector<64x64xf32>
    %cst_98 = arith.constant 1.000000e+00 : f32
    %264 = vector.broadcast %cst_98 : f32 to vector<64x64xf32>
    %265 = arith.addf %264, %263 : vector<64x64xf32>
    %cst_99 = arith.constant 5.000000e-01 : f32
    %266 = vector.broadcast %cst_99 : f32 to vector<64x64xf32>
    %267 = arith.mulf %266, %265 : vector<64x64xf32>
    %268 = arith.mulf %255, %267 : vector<64x64xf32>
    %269 = arith.truncf %268 : vector<64x64xf32> to vector<64x64xbf16>
    %cst_100 = arith.constant dense<0.000000e+00> : vector<64x32xf32>
    %270 = tpu.matmul %269, %25, %cst_100 {dimension_numbers = #tpu.dot_dimension_numbers<[1], [0], [0], [1], [0, 0, 1, 1], [], []>} : vector<64x64xbf16>, vector<64x32xbf16>, vector<64x32xf32> -> vector<64x32xf32>
    %271 = vector.broadcast %27 : vector<1x32xf32> to vector<64x32xf32>
    %272 = arith.addf %270, %271 : vector<64x32xf32>
    %273 = arith.addf %229, %272 : vector<64x32xf32>
    %c0_101 = arith.constant 0 : index
    %c0_102 = arith.constant 0 : index
    %274 = vector.load %arg17[%c0_101, %c0_102] : memref<64x32xf32, #tpu.memory_space<vmem>>, vector<64x32xf32>
    tpu.vector_store %arg17[%c0_101, %c0_102], %273 {strides = array<i32>} : memref<64x32xf32, #tpu.memory_space<vmem>>, vector<64x32xf32>,
    return
  }
  func.func @transform_0(%arg0: i32, %arg1: i32) -> (i32, i32) {
    %c0_i32 = arith.constant 0 : i32
    %c0_i32_0 = arith.constant 0 : i32
    return %arg0, %c0_i32 : i32, i32
  }
  func.func @transform_1(%arg0: i32, %arg1: i32) -> (i32, i32) {
    %c0_i32 = arith.constant 0 : i32
    %c0_i32_0 = arith.constant 0 : i32
    %c0_i32_1 = arith.constant 0 : i32
    return %c0_i32, %c0_i32_0 : i32, i32
  }
  func.func @transform_2(%arg0: i32, %arg1: i32) -> (i32, i32) {
    %c0_i32 = arith.constant 0 : i32
    %c0_i32_0 = arith.constant 0 : i32
    %c0_i32_1 = arith.constant 0 : i32
    return %c0_i32, %c0_i32_0 : i32, i32
  }
  func.func @transform_3(%arg0: i32, %arg1: i32) -> (i32, i32, i32) {
    %c0_i32 = arith.constant 0 : i32
    %c0_i32_0 = arith.constant 0 : i32
    %c0_i32_1 = arith.constant 0 : i32
    return %arg1, %c0_i32, %c0_i32_0 : i32, i32, i32
  }
  func.func @transform_4(%arg0: i32, %arg1: i32) -> (i32, i32, i32) {
    %c0_i32 = arith.constant 0 : i32
    %c0_i32_0 = arith.constant 0 : i32
    %c0_i32_1 = arith.constant 0 : i32
    return %arg1, %c0_i32, %c0_i32_0 : i32, i32, i32
  }
  func.func @transform_5(%arg0: i32, %arg1: i32) -> (i32, i32, i32) {
    %c0_i32 = arith.constant 0 : i32
    %c0_i32_0 = arith.constant 0 : i32
    %c0_i32_1 = arith.constant 0 : i32
    return %arg1, %c0_i32, %c0_i32_0 : i32, i32, i32
  }
  func.func @transform_6(%arg0: i32, %arg1: i32) -> (i32, i32, i32) {
    %c0_i32 = arith.constant 0 : i32
    %c0_i32_0 = arith.constant 0 : i32
    %c0_i32_1 = arith.constant 0 : i32
    return %arg1, %c0_i32, %c0_i32_0 : i32, i32, i32
  }
  func.func @transform_7(%arg0: i32, %arg1: i32) -> (i32, i32, i32) {
    %c0_i32 = arith.constant 0 : i32
    %c0_i32_0 = arith.constant 0 : i32
    %c0_i32_1 = arith.constant 0 : i32
    return %arg1, %c0_i32, %c0_i32_0 : i32, i32, i32
  }
  func.func @transform_8(%arg0: i32, %arg1: i32) -> (i32, i32, i32) {
    %c0_i32 = arith.constant 0 : i32
    %c0_i32_0 = arith.constant 0 : i32
    %c0_i32_1 = arith.constant 0 : i32
    return %arg1, %c0_i32, %c0_i32_0 : i32, i32, i32
  }
  func.func @transform_9(%arg0: i32, %arg1: i32) -> (i32, i32, i32) {
    %c0_i32 = arith.constant 0 : i32
    %c0_i32_0 = arith.constant 0 : i32
    %c0_i32_1 = arith.constant 0 : i32
    return %arg1, %c0_i32, %c0_i32_0 : i32, i32, i32
  }
  func.func @transform_10(%arg0: i32, %arg1: i32) -> (i32, i32, i32) {
    %c0_i32 = arith.constant 0 : i32
    %c0_i32_0 = arith.constant 0 : i32
    %c0_i32_1 = arith.constant 0 : i32
    return %arg1, %c0_i32, %c0_i32_0 : i32, i32, i32
  }
  func.func @transform_11(%arg0: i32, %arg1: i32) -> (i32, i32, i32) {
    %c0_i32 = arith.constant 0 : i32
    %c0_i32_0 = arith.constant 0 : i32
    %c0_i32_1 = arith.constant 0 : i32
    return %arg1, %c0_i32, %c0_i32_0 : i32, i32, i32
  }
  func.func @transform_12(%arg0: i32, %arg1: i32) -> (i32, i32, i32) {
    %c0_i32 = arith.constant 0 : i32
    %c0_i32_0 = arith.constant 0 : i32
    %c0_i32_1 = arith.constant 0 : i32
    return %arg1, %c0_i32, %c0_i32_0 : i32, i32, i32
  }
  func.func @transform_13(%arg0: i32, %arg1: i32) -> (i32, i32, i32) {
    %c0_i32 = arith.constant 0 : i32
    %c0_i32_0 = arith.constant 0 : i32
    %c0_i32_1 = arith.constant 0 : i32
    return %arg1, %c0_i32, %c0_i32_0 : i32, i32, i32
  }
  func.func @transform_14(%arg0: i32, %arg1: i32) -> (i32, i32, i32) {
    %c0_i32 = arith.constant 0 : i32
    %c0_i32_0 = arith.constant 0 : i32
    %c0_i32_1 = arith.constant 0 : i32
    return %arg1, %c0_i32, %c0_i32_0 : i32, i32, i32
  }
  func.func @transform_15(%arg0: i32, %arg1: i32) -> (i32, i32) {
    %c0_i32 = arith.constant 0 : i32
    %c0_i32_0 = arith.constant 0 : i32
    return %arg0, %c0_i32 : i32, i32
  }
}

</mosaic_0001>

<llo_original>
// kernel: tpu_custom_call.1
$region0: #{tpu_custom_call.1}
  #allocation0 [shape = 'u32[]', space=smem, size = 0x4, offset = 0x4, fixed_abs, tag = 'smem constant byte address 0x4 - core index']
  #allocation1 [shape = 'u32[72,128]{1,0:T(1,128)}', space=vmem, size = 0x9000, scoped, tag = 'internal scratch']
  %s0 = inlined_call_operand.vmem [shape: f32[64,16], index: 0, kind: input, shape index: {}]
  %s1 = inlined_call_operand.vmem [shape: bf16[16,32], index: 1, kind: input, shape index: {}]
  %s2 = inlined_call_operand.vmem [shape: f32[1,32], index: 2, kind: input, shape index: {}]
  %s3 = inlined_call_operand.vmem [shape: f32[2,1,32], index: 3, kind: input, shape index: {}]
  %s4 = inlined_call_operand.vmem [shape: f32[2,1,32], index: 4, kind: input, shape index: {}]
  %s5 = inlined_call_operand.vmem [shape: bf16[2,16,8], index: 5, kind: input, shape index: {}]
  %s6 = inlined_call_operand.vmem [shape: f32[2,16,1], index: 6, kind: input, shape index: {}]
  %s7 = inlined_call_operand.vmem [shape: bf16[2,8,16], index: 7, kind: input, shape index: {}]
  %s8 = inlined_call_operand.vmem [shape: f32[2,8,1], index: 8, kind: input, shape index: {}]
  %s9 = inlined_call_operand.vmem [shape: f32[2,1,32], index: 9, kind: input, shape index: {}]
  %s10 = inlined_call_operand.vmem [shape: f32[2,1,32], index: 10, kind: input, shape index: {}]
  %s11 = inlined_call_operand.vmem [shape: bf16[2,32,64], index: 11, kind: input, shape index: {}]
  %s12 = inlined_call_operand.vmem [shape: f32[2,1,64], index: 12, kind: input, shape index: {}]
  %s13 = inlined_call_operand.vmem [shape: bf16[2,64,32], index: 13, kind: input, shape index: {}]
  %s14 = inlined_call_operand.vmem [shape: f32[2,1,32], index: 14, kind: input, shape index: {}]
  %s15 = inlined_call_operand.vmem [shape: f32[64,32], index: 15, kind: output, shape index: {}]
  %s16 = sld [smem:[#allocation0]]
  $region97: #{tpu_custom_call.1} parent=0
    _
  %s18 = ssub.s32 1, %s16
  %s19 = scalar_select 0, %s18, %s16
  loop: start=0, step=1, limit=4
  $region2: #{tpu_custom_call.1} parent=0 // loop_pre_header
    _
  $region3: #{tpu_custom_call.1} parent=0 // loop_header
    %s21 = sphi 0, %s25
    %p22 = scmp.ge.s32.totalorder %s21, 4
    %s28 = sphi 0, %s40
    %s29 = sphi 0, %s36
    %s30 = sphi 0, %s28
    %s31 = sphi 0, %s29
    %s32 = sphi 0, %s30
    %s33 = sphi 0, %s31
    %s43 = sphi 0, %s45
    %s46 = sphi 0, %s43
    %s47 = sphi 0, %s46
    %s63 = sphi 0, %s47
    %s67 = sphi 0, %s67
    %s69 = sphi 0, %s67
    %s70 = sphi 0, %s69
    %s84 = sphi 0, %s70
    %s88 = sphi 0, %s88
    %s90 = sphi 0, %s88
    %s91 = sphi 0, %s90
    %s105 = sphi 0, %s91
    %s111 = sphi 0, %s113
    %s114 = sphi 0, %s111
    %s115 = sphi 0, %s114
    %s131 = sphi 0, %s115
    %s137 = sphi 0, %s139
    %s140 = sphi 0, %s137
    %s141 = sphi 0, %s140
    %s157 = sphi 0, %s141
    %s163 = sphi 0, %s165
    %s166 = sphi 0, %s163
    %s167 = sphi 0, %s166
    %s183 = sphi 0, %s167
    %s189 = sphi 0, %s191
    %s192 = sphi 0, %s189
    %s193 = sphi 0, %s192
    %s209 = sphi 0, %s193
    %s215 = sphi 0, %s217
    %s218 = sphi 0, %s215
    %s219 = sphi 0, %s218
    %s235 = sphi 0, %s219
    %s241 = sphi 0, %s243
    %s244 = sphi 0, %s241
    %s245 = sphi 0, %s244
    %s261 = sphi 0, %s245
    %s267 = sphi 0, %s269
    %s270 = sphi 0, %s267
    %s271 = sphi 0, %s270
    %s287 = sphi 0, %s271
    %s293 = sphi 0, %s295
    %s296 = sphi 0, %s293
    %s297 = sphi 0, %s296
    %s313 = sphi 0, %s297
    %s319 = sphi 0, %s321
    %s322 = sphi 0, %s319
    %s323 = sphi 0, %s322
    %s339 = sphi 0, %s323
    %s345 = sphi 0, %s347
    %s348 = sphi 0, %s345
    %s349 = sphi 0, %s348
    %s365 = sphi 0, %s349
    %s371 = sphi 0, %s373
    %s374 = sphi 0, %s371
    %s375 = sphi 0, %s374
    %s391 = sphi 0, %s375
    %s397 = sphi 0, %s399
    %s400 = sphi 0, %s397
    %s401 = sphi 0, %s400
    %s417 = sphi 0, %s401
    %s423 = sphi 0, %s425
    %s426 = sphi 0, %s423
    %s427 = sphi 0, %s426
    %s443 = sphi 0, %s427
  $region4: #{tpu_custom_call.1} parent=0 // loop_header_branch
    %24 = sbr.rel (%p22) target = $region8
  $region5: #{tpu_custom_call.1} parent=0 // loop_body
    %s26 = ssub.s32 %s21, 1
    %s27 = ssub.s32 %s21, 2
    %s34 = sadd.s32 1, %s29
    %p35 = scmp.ge.s32.totalorder %s34, 2
    %s36 = scalar_select %p35, 0, %s34
    %s37 = sadd.s32 1, %s28
    %s38 = scalar_select %p35, %s37, %s28
    %p39 = scmp.ge.s32.totalorder %s38, 1
    %s40 = scalar_select %p39, 0, %s38
    %s41 = ssub.s32 %s28, %s40
    %p42 = scmp.eq.s32.totalorder %s41, 0
    %s44 = sadd.s32 %s43, 1
    %s45 = scalar_select %p42, %s43, %s44
    %p48 = pneg %p42
    %p49 = scmp.eq.s32.totalorder %s21, 1
    %p50 = por %p48, %p49
    %p51 = scmp.ne.s32.totalorder %s43, %s46
    %p52 = scmp.eq.s32.totalorder %s21, 0
    %p53 = por %p51, %p52
    %p54 = scmp.ne.s32.totalorder %s43, %s46
    %p55 = scmp.eq.s32.totalorder %s26, 1
    %p56 = por %p54, %p55
    %p57 = scmp.ne.s32.totalorder %s46, %s47
    %p58 = scmp.eq.s32.totalorder %s26, 0
    %p59 = por %p57, %p58
    %p60 = scmp.ne.s32.totalorder %s46, %s47
    %p61 = scmp.eq.s32.totalorder %s27, 1
    %p62 = por %p60, %p61
    %p64 = scmp.ne.s32.totalorder %s47, %s63
    %p65 = scmp.eq.s32.totalorder %s27, 0
    %p66 = por %p64, %p65
    %s68 = sadd.s32 %s67, 1
    %p71 = scmp.eq.s32.totalorder %s21, 1
    %p72 = scmp.ne.s32.totalorder %s67, %s69
    %p73 = scmp.eq.s32.totalorder %s21, 0
    %p74 = por %p72, %p73
    %p75 = scmp.ne.s32.totalorder %s67, %s69
    %p76 = scmp.eq.s32.totalorder %s26, 1
    %p77 = por %p75, %p76
    %p78 = scmp.ne.s32.totalorder %s69, %s70
    %p79 = scmp.eq.s32.totalorder %s26, 0
    %p80 = por %p78, %p79
    %p81 = scmp.ne.s32.totalorder %s69, %s70
    %p82 = scmp.eq.s32.totalorder %s27, 1
    %p83 = por %p81, %p82
    %p85 = scmp.ne.s32.totalorder %s70, %s84
    %p86 = scmp.eq.s32.totalorder %s27, 0
    %p87 = por %p85, %p86
    %s89 = sadd.s32 %s88, 1
    %p92 = scmp.eq.s32.totalorder %s21, 1
    %p93 = scmp.ne.s32.totalorder %s88, %s90
    %p94 = scmp.eq.s32.totalorder %s21, 0
    %p95 = por %p93, %p94
    %p96 = scmp.ne.s32.totalorder %s88, %s90
    %p97 = scmp.eq.s32.totalorder %s26, 1
    %p98 = por %p96, %p97
    %p99 = scmp.ne.s32.totalorder %s90, %s91
    %p100 = scmp.eq.s32.totalorder %s26, 0
    %p101 = por %p99, %p100
    %p102 = scmp.ne.s32.totalorder %s90, %s91
    %p103 = scmp.eq.s32.totalorder %s27, 1
    %p104 = por %p102, %p103
    %p106 = scmp.ne.s32.totalorder %s91, %s105
    %p107 = scmp.eq.s32.totalorder %s27, 0
    %p108 = por %p106, %p107
    %s109 = ssub.s32 %s29, %s36
    %p110 = scmp.eq.s32.totalorder %s109, 0
    %s112 = sadd.s32 %s111, 1
    %s113 = scalar_select %p110, %s111, %s112
    %p116 = pneg %p110
    %p117 = scmp.eq.s32.totalorder %s21, 1
    %p118 = por %p116, %p117
    %p119 = scmp.ne.s32.totalorder %s111, %s114
    %p120 = scmp.eq.s32.totalorder %s21, 0
    %p121 = por %p119, %p120
    %p122 = scmp.ne.s32.totalorder %s111, %s114
    %p123 = scmp.eq.s32.totalorder %s26, 1
    %p124 = por %p122, %p123
    %p125 = scmp.ne.s32.totalorder %s114, %s115
    %p126 = scmp.eq.s32.totalorder %s26, 0
    %p127 = por %p125, %p126
    %p128 = scmp.ne.s32.totalorder %s114, %s115
    %p129 = scmp.eq.s32.totalorder %s27, 1
    %p130 = por %p128, %p129
    %p132 = scmp.ne.s32.totalorder %s115, %s131
    %p133 = scmp.eq.s32.totalorder %s27, 0
    %p134 = por %p132, %p133
    %s135 = ssub.s32 %s29, %s36
    %p136 = scmp.eq.s32.totalorder %s135, 0
    %s138 = sadd.s32 %s137, 1
    %s139 = scalar_select %p136, %s137, %s138
    %p142 = pneg %p136
    %p143 = scmp.eq.s32.totalorder %s21, 1
    %p144 = por %p142, %p143
    %p145 = scmp.ne.s32.totalorder %s137, %s140
    %p146 = scmp.eq.s32.totalorder %s21, 0
    %p147 = por %p145, %p146
    %p148 = scmp.ne.s32.totalorder %s137, %s140
    %p149 = scmp.eq.s32.totalorder %s26, 1
    %p150 = por %p148, %p149
    %p151 = scmp.ne.s32.totalorder %s140, %s141
    %p152 = scmp.eq.s32.totalorder %s26, 0
    %p153 = por %p151, %p152
    %p154 = scmp.ne.s32.totalorder %s140, %s141
    %p155 = scmp.eq.s32.totalorder %s27, 1
    %p156 = por %p154, %p155
    %p158 = scmp.ne.s32.totalorder %s141, %s157
    %p159 = scmp.eq.s32.totalorder %s27, 0
    %p160 = por %p158, %p159
    %s161 = ssub.s32 %s29, %s36
    %p162 = scmp.eq.s32.totalorder %s161, 0
    %s164 = sadd.s32 %s163, 1
    %s165 = scalar_select %p162, %s163, %s164
    %p168 = pneg %p162
    %p169 = scmp.eq.s32.totalorder %s21, 1
    %p170 = por %p168, %p169
    %p171 = scmp.ne.s32.totalorder %s163, %s166
    %p172 = scmp.eq.s32.totalorder %s21, 0
    %p173 = por %p171, %p172
    %p174 = scmp.ne.s32.totalorder %s163, %s166
    %p175 = scmp.eq.s32.totalorder %s26, 1
    %p176 = por %p174, %p175
    %p177 = scmp.ne.s32.totalorder %s166, %s167
    %p178 = scmp.eq.s32.totalorder %s26, 0
    %p179 = por %p177, %p178
    %p180 = scmp.ne.s32.totalorder %s166, %s167
    %p181 = scmp.eq.s32.totalorder %s27, 1
    %p182 = por %p180, %p181
    %p184 = scmp.ne.s32.totalorder %s167, %s183
    %p185 = scmp.eq.s32.totalorder %s27, 0
    %p186 = por %p184, %p185
    %s187 = ssub.s32 %s29, %s36
    %p188 = scmp.eq.s32.totalorder %s187, 0
    %s190 = sadd.s32 %s189, 1
    %s191 = scalar_select %p188, %s189, %s190
    %p194 = pneg %p188
    %p195 = scmp.eq.s32.totalorder %s21, 1
    %p196 = por %p194, %p195
    %p197 = scmp.ne.s32.totalorder %s189, %s192
    %p198 = scmp.eq.s32.totalorder %s21, 0
    %p199 = por %p197, %p198
    %p200 = scmp.ne.s32.totalorder %s189, %s192
    %p201 = scmp.eq.s32.totalorder %s26, 1
    %p202 = por %p200, %p201
    %p203 = scmp.ne.s32.totalorder %s192, %s193
    %p204 = scmp.eq.s32.totalorder %s26, 0
    %p205 = por %p203, %p204
    %p206 = scmp.ne.s32.totalorder %s192, %s193
    %p207 = scmp.eq.s32.totalorder %s27, 1
    %p208 = por %p206, %p207
    %p210 = scmp.ne.s32.totalorder %s193, %s209
    %p211 = scmp.eq.s32.totalorder %s27, 0
    %p212 = por %p210, %p211
    %s213 = ssub.s32 %s29, %s36
    %p214 = scmp.eq.s32.totalorder %s213, 0
    %s216 = sadd.s32 %s215, 1
    %s217 = scalar_select %p214, %s215, %s216
    %p220 = pneg %p214
    %p221 = scmp.eq.s32.totalorder %s21, 1
    %p222 = por %p220, %p221
    %p223 = scmp.ne.s32.totalorder %s215, %s218
    %p224 = scmp.eq.s32.totalorder %s21, 0
    %p225 = por %p223, %p224
    %p226 = scmp.ne.s32.totalorder %s215, %s218
    %p227 = scmp.eq.s32.totalorder %s26, 1
    %p228 = por %p226, %p227
    %p229 = scmp.ne.s32.totalorder %s218, %s219
    %p230 = scmp.eq.s32.totalorder %s26, 0
    %p231 = por %p229, %p230
    %p232 = scmp.ne.s32.totalorder %s218, %s219
    %p233 = scmp.eq.s32.totalorder %s27, 1
    %p234 = por %p232, %p233
    %p236 = scmp.ne.s32.totalorder %s219, %s235
    %p237 = scmp.eq.s32.totalorder %s27, 0
    %p238 = por %p236, %p237
    %s239 = ssub.s32 %s29, %s36
    %p240 = scmp.eq.s32.totalorder %s239, 0
    %s242 = sadd.s32 %s241, 1
    %s243 = scalar_select %p240, %s241, %s242
    %p246 = pneg %p240
    %p247 = scmp.eq.s32.totalorder %s21, 1
    %p248 = por %p246, %p247
    %p249 = scmp.ne.s32.totalorder %s241, %s244
    %p250 = scmp.eq.s32.totalorder %s21, 0
    %p251 = por %p249, %p250
    %p252 = scmp.ne.s32.totalorder %s241, %s244
    %p253 = scmp.eq.s32.totalorder %s26, 1
    %p254 = por %p252, %p253
    %p255 = scmp.ne.s32.totalorder %s244, %s245
    %p256 = scmp.eq.s32.totalorder %s26, 0
    %p257 = por %p255, %p256
    %p258 = scmp.ne.s32.totalorder %s244, %s245
    %p259 = scmp.eq.s32.totalorder %s27, 1
    %p260 = por %p258, %p259
    %p262 = scmp.ne.s32.totalorder %s245, %s261
    %p263 = scmp.eq.s32.totalorder %s27, 0
    %p264 = por %p262, %p263
    %s265 = ssub.s32 %s29, %s36
    %p266 = scmp.eq.s32.totalorder %s265, 0
    %s268 = sadd.s32 %s267, 1
    %s269 = scalar_select %p266, %s267, %s268
    %p272 = pneg %p266
    %p273 = scmp.eq.s32.totalorder %s21, 1
    %p274 = por %p272, %p273
    %p275 = scmp.ne.s32.totalorder %s267, %s270
    %p276 = scmp.eq.s32.totalorder %s21, 0
    %p277 = por %p275, %p276
    %p278 = scmp.ne.s32.totalorder %s267, %s270
    %p279 = scmp.eq.s32.totalorder %s26, 1
    %p280 = por %p278, %p279
    %p281 = scmp.ne.s32.totalorder %s270, %s271
    %p282 = scmp.eq.s32.totalorder %s26, 0
    %p283 = por %p281, %p282
    %p284 = scmp.ne.s32.totalorder %s270, %s271
    %p285 = scmp.eq.s32.totalorder %s27, 1
    %p286 = por %p284, %p285
    %p288 = scmp.ne.s32.totalorder %s271, %s287
    %p289 = scmp.eq.s32.totalorder %s27, 0
    %p290 = por %p288, %p289
    %s291 = ssub.s32 %s29, %s36
    %p292 = scmp.eq.s32.totalorder %s291, 0
    %s294 = sadd.s32 %s293, 1
    %s295 = scalar_select %p292, %s293, %s294
    %p298 = pneg %p292
    %p299 = scmp.eq.s32.totalorder %s21, 1
    %p300 = por %p298, %p299
    %p301 = scmp.ne.s32.totalorder %s293, %s296
    %p302 = scmp.eq.s32.totalorder %s21, 0
    %p303 = por %p301, %p302
    %p304 = scmp.ne.s32.totalorder %s293, %s296
    %p305 = scmp.eq.s32.totalorder %s26, 1
    %p306 = por %p304, %p305
    %p307 = scmp.ne.s32.totalorder %s296, %s297
    %p308 = scmp.eq.s32.totalorder %s26, 0
    %p309 = por %p307, %p308
    %p310 = scmp.ne.s32.totalorder %s296, %s297
    %p311 = scmp.eq.s32.totalorder %s27, 1
    %p312 = por %p310, %p311
    %p314 = scmp.ne.s32.totalorder %s297, %s313
    %p315 = scmp.eq.s32.totalorder %s27, 0
    %p316 = por %p314, %p315
    %s317 = ssub.s32 %s29, %s36
    %p318 = scmp.eq.s32.totalorder %s317, 0
    %s320 = sadd.s32 %s319, 1
    %s321 = scalar_select %p318, %s319, %s320
    %p324 = pneg %p318
    %p325 = scmp.eq.s32.totalorder %s21, 1
    %p326 = por %p324, %p325
    %p327 = scmp.ne.s32.totalorder %s319, %s322
    %p328 = scmp.eq.s32.totalorder %s21, 0
    %p329 = por %p327, %p328
    %p330 = scmp.ne.s32.totalorder %s319, %s322
    %p331 = scmp.eq.s32.totalorder %s26, 1
    %p332 = por %p330, %p331
    %p333 = scmp.ne.s32.totalorder %s322, %s323
    %p334 = scmp.eq.s32.totalorder %s26, 0
    %p335 = por %p333, %p334
    %p336 = scmp.ne.s32.totalorder %s322, %s323
    %p337 = scmp.eq.s32.totalorder %s27, 1
    %p338 = por %p336, %p337
    %p340 = scmp.ne.s32.totalorder %s323, %s339
    %p341 = scmp.eq.s32.totalorder %s27, 0
    %p342 = por %p340, %p341
    %s343 = ssub.s32 %s29, %s36
    %p344 = scmp.eq.s32.totalorder %s343, 0
    %s346 = sadd.s32 %s345, 1
    %s347 = scalar_select %p344, %s345, %s346
    %p350 = pneg %p344
    %p351 = scmp.eq.s32.totalorder %s21, 1
    %p352 = por %p350, %p351
    %p353 = scmp.ne.s32.totalorder %s345, %s348
    %p354 = scmp.eq.s32.totalorder %s21, 0
    %p355 = por %p353, %p354
    %p356 = scmp.ne.s32.totalorder %s345, %s348
    %p357 = scmp.eq.s32.totalorder %s26, 1
    %p358 = por %p356, %p357
    %p359 = scmp.ne.s32.totalorder %s348, %s349
    %p360 = scmp.eq.s32.totalorder %s26, 0
    %p361 = por %p359, %p360
    %p362 = scmp.ne.s32.totalorder %s348, %s349
    %p363 = scmp.eq.s32.totalorder %s27, 1
    %p364 = por %p362, %p363
    %p366 = scmp.ne.s32.totalorder %s349, %s365
    %p367 = scmp.eq.s32.totalorder %s27, 0
    %p368 = por %p366, %p367
    %s369 = ssub.s32 %s29, %s36
    %p370 = scmp.eq.s32.totalorder %s369, 0
    %s372 = sadd.s32 %s371, 1
    %s373 = scalar_select %p370, %s371, %s372
    %p376 = pneg %p370
    %p377 = scmp.eq.s32.totalorder %s21, 1
    %p378 = por %p376, %p377
    %p379 = scmp.ne.s32.totalorder %s371, %s374
    %p380 = scmp.eq.s32.totalorder %s21, 0
    %p381 = por %p379, %p380
    %p382 = scmp.ne.s32.totalorder %s371, %s374
    %p383 = scmp.eq.s32.totalorder %s26, 1
    %p384 = por %p382, %p383
    %p385 = scmp.ne.s32.totalorder %s374, %s375
    %p386 = scmp.eq.s32.totalorder %s26, 0
    %p387 = por %p385, %p386
    %p388 = scmp.ne.s32.totalorder %s374, %s375
    %p389 = scmp.eq.s32.totalorder %s27, 1
    %p390 = por %p388, %p389
    %p392 = scmp.ne.s32.totalorder %s375, %s391
    %p393 = scmp.eq.s32.totalorder %s27, 0
    %p394 = por %p392, %p393
    %s395 = ssub.s32 %s29, %s36
    %p396 = scmp.eq.s32.totalorder %s395, 0
    %s398 = sadd.s32 %s397, 1
    %s399 = scalar_select %p396, %s397, %s398
    %p402 = pneg %p396
    %p403 = scmp.eq.s32.totalorder %s21, 1
    %p404 = por %p402, %p403
    %p405 = scmp.ne.s32.totalorder %s397, %s400
    %p406 = scmp.eq.s32.totalorder %s21, 0
    %p407 = por %p405, %p406
    %p408 = scmp.ne.s32.totalorder %s397, %s400
    %p409 = scmp.eq.s32.totalorder %s26, 1
    %p410 = por %p408, %p409
    %p411 = scmp.ne.s32.totalorder %s400, %s401
    %p412 = scmp.eq.s32.totalorder %s26, 0
    %p413 = por %p411, %p412
    %p414 = scmp.ne.s32.totalorder %s400, %s401
    %p415 = scmp.eq.s32.totalorder %s27, 1
    %p416 = por %p414, %p415
    %p418 = scmp.ne.s32.totalorder %s401, %s417
    %p419 = scmp.eq.s32.totalorder %s27, 0
    %p420 = por %p418, %p419
    %s421 = ssub.s32 %s28, %s40
    %p422 = scmp.eq.s32.totalorder %s421, 0
    %s424 = sadd.s32 %s423, 1
    %s425 = scalar_select %p422, %s423, %s424
    %p428 = pneg %p422
    %p429 = scmp.eq.s32.totalorder %s21, 1
    %p430 = por %p428, %p429
    %p431 = scmp.ne.s32.totalorder %s423, %s426
    %p432 = scmp.eq.s32.totalorder %s21, 0
    %p433 = por %p431, %p432
    %p434 = scmp.ne.s32.totalorder %s423, %s426
    %p435 = scmp.eq.s32.totalorder %s26, 1
    %p436 = por %p434, %p435
    %p437 = scmp.ne.s32.totalorder %s426, %s427
    %p438 = scmp.eq.s32.totalorder %s26, 0
    %p439 = por %p437, %p438
    %p440 = scmp.ne.s32.totalorder %s426, %s427
    %p441 = scmp.eq.s32.totalorder %s27, 1
    %p442 = por %p440, %p441
    %p444 = scmp.ne.s32.totalorder %s427, %s443
    %p445 = scmp.eq.s32.totalorder %s27, 0
    %p446 = por %p444, %p445
    %p447 = scmp.le.s32.totalorder 1, %s21
    %p448 = scmp.lt.s32.totalorder %s21, 3
    %p449 = pnand %p447, %p448
    %p450 = pneg %p449
    // Predicated region
    $region9: #{tpu_custom_call.1} parent=5 // pred_check
      _
    $region10: #{tpu_custom_call.1} parent=5 // pred_check_branch
      %452 = sbr.rel (%p449) target = $region12
    $region11: #{tpu_custom_call.1} parent=5 // pred_region
      %s453 = ssub.s32 %s21, 1
      // Predicated region
      $region13: #{tpu_custom_call.1} parent=11 // pred_check
        %p454 = pneg %p59
      $region14: #{tpu_custom_call.1} parent=11 // pred_check_branch
        %456 = sbr.rel (%p454) target = $region16
      $region15: #{tpu_custom_call.1} parent=11 // pred_region
        %s457 = smul.u32 8, %s30
        %p458 = scmp.lt.s32.totalorder %s457, 7
        %s459 = scalar_select %p458, %s457, 7
        %s460 = smul.addr %s459, 8
        %s461 = scalar_lea.vmem %s0, %s460
        %s462 = smul.u32 8, %s30
      $region16: #{tpu_custom_call.1} parent=11 // pred_fallthru
        _
      // Predicated region
      $region17: #{tpu_custom_call.1} parent=11 // pred_check
        %p463 = pneg %p80
      $region18: #{tpu_custom_call.1} parent=11 // pred_check_branch
        %465 = sbr.rel (%p463) target = $region20
      $region19: #{tpu_custom_call.1} parent=11 // pred_region
        _
      $region20: #{tpu_custom_call.1} parent=11 // pred_fallthru
        _
      // Predicated region
      $region21: #{tpu_custom_call.1} parent=11 // pred_check
        %p466 = pneg %p101
      $region22: #{tpu_custom_call.1} parent=11 // pred_check_branch
        %468 = sbr.rel (%p466) target = $region24
      $region23: #{tpu_custom_call.1} parent=11 // pred_region
        _
      $region24: #{tpu_custom_call.1} parent=11 // pred_fallthru
        _
    $region12: #{tpu_custom_call.1} parent=5 // pred_fallthru
      _
    %p469 = scmp.lt.s32.totalorder %s21, 2
    // Predicated region
    $region25: #{tpu_custom_call.1} parent=5 // pred_check
      %p470 = pneg %p469
    $region26: #{tpu_custom_call.1} parent=5 // pred_check_branch
      %472 = sbr.rel (%p470) target = $region28
    $region27: #{tpu_custom_call.1} parent=5 // pred_region
      // Predicated region
      $region29: #{tpu_custom_call.1} parent=27 // pred_check
        %p473 = pneg %p121
      $region30: #{tpu_custom_call.1} parent=27 // pred_check_branch
        %475 = sbr.rel (%p473) target = $region32
      $region31: #{tpu_custom_call.1} parent=27 // pred_region
        %p476 = scmp.lt.s32.totalorder %s29, 1
        %s477 = scalar_select %p476, %s29, 1
        %s478 = scalar_lea.vmem %s3, %s477
      $region32: #{tpu_custom_call.1} parent=27 // pred_fallthru
        _
      // Predicated region
      $region33: #{tpu_custom_call.1} parent=27 // pred_check
        %p479 = pneg %p147
      $region34: #{tpu_custom_call.1} parent=27 // pred_check_branch
        %481 = sbr.rel (%p479) target = $region36
      $region35: #{tpu_custom_call.1} parent=27 // pred_region
        %p482 = scmp.lt.s32.totalorder %s29, 1
        %s483 = scalar_select %p482, %s29, 1
        %s484 = scalar_lea.vmem %s4, %s483
      $region36: #{tpu_custom_call.1} parent=27 // pred_fallthru
        _
      // Predicated region
      $region37: #{tpu_custom_call.1} parent=27 // pred_check
        %p485 = pneg %p173
      $region38: #{tpu_custom_call.1} parent=27 // pred_check_branch
        %487 = sbr.rel (%p485) target = $region40
      $region39: #{tpu_custom_call.1} parent=27 // pred_region
        %p488 = scmp.lt.s32.totalorder %s29, 1
        %s489 = scalar_select %p488, %s29, 1
        %s490 = smul.addr %s489, 2
        %s491 = smul.addr %s490, 4
        %s492 = scalar_lea.vmem %s5, %s491
      $region40: #{tpu_custom_call.1} parent=27 // pred_fallthru
        _
      // Predicated region
      $region41: #{tpu_custom_call.1} parent=27 // pred_check
        %p493 = pneg %p199
      $region42: #{tpu_custom_call.1} parent=27 // pred_check_branch
        %495 = sbr.rel (%p493) target = $region44
      $region43: #{tpu_custom_call.1} parent=27 // pred_region
        %p496 = scmp.lt.s32.totalorder %s29, 1
        %s497 = scalar_select %p496, %s29, 1
        %s498 = smul.addr %s497, 2
        %s499 = smul.addr %s498, 8
        %s500 = scalar_lea.vmem %s6, %s499
      $region44: #{tpu_custom_call.1} parent=27 // pred_fallthru
        _
      // Predicated region
      $region45: #{tpu_custom_call.1} parent=27 // pred_check
        %p501 = pneg %p225
      $region46: #{tpu_custom_call.1} parent=27 // pred_check_branch
        %503 = sbr.rel (%p501) target = $region48
      $region47: #{tpu_custom_call.1} parent=27 // pred_region
        %p504 = scmp.lt.s32.totalorder %s29, 1
        %s505 = scalar_select %p504, %s29, 1
        %s506 = smul.addr %s505, 4
        %s507 = scalar_lea.vmem %s7, %s506
      $region48: #{tpu_custom_call.1} parent=27 // pred_fallthru
        _
      // Predicated region
      $region49: #{tpu_custom_call.1} parent=27 // pred_check
        %p508 = pneg %p251
      $region50: #{tpu_custom_call.1} parent=27 // pred_check_branch
        %510 = sbr.rel (%p508) target = $region52
      $region51: #{tpu_custom_call.1} parent=27 // pred_region
        %p511 = scmp.lt.s32.totalorder %s29, 1
        %s512 = scalar_select %p511, %s29, 1
        %s513 = smul.addr %s512, 8
        %s514 = scalar_lea.vmem %s8, %s513
      $region52: #{tpu_custom_call.1} parent=27 // pred_fallthru
        _
      // Predicated region
      $region53: #{tpu_custom_call.1} parent=27 // pred_check
        %p515 = pneg %p277
      $region54: #{tpu_custom_call.1} parent=27 // pred_check_branch
        %517 = sbr.rel (%p515) target = $region56
      $region55: #{tpu_custom_call.1} parent=27 // pred_region
        %p518 = scmp.lt.s32.totalorder %s29, 1
        %s519 = scalar_select %p518, %s29, 1
        %s520 = scalar_lea.vmem %s9, %s519
      $region56: #{tpu_custom_call.1} parent=27 // pred_fallthru
        _
      // Predicated region
      $region57: #{tpu_custom_call.1} parent=27 // pred_check
        %p521 = pneg %p303
      $region58: #{tpu_custom_call.1} parent=27 // pred_check_branch
        %523 = sbr.rel (%p521) target = $region60
      $region59: #{tpu_custom_call.1} parent=27 // pred_region
        %p524 = scmp.lt.s32.totalorder %s29, 1
        %s525 = scalar_select %p524, %s29, 1
        %s526 = scalar_lea.vmem %s10, %s525
      $region60: #{tpu_custom_call.1} parent=27 // pred_fallthru
        _
      // Predicated region
      $region61: #{tpu_custom_call.1} parent=27 // pred_check
        %p527 = pneg %p329
      $region62: #{tpu_custom_call.1} parent=27 // pred_check_branch
        %529 = sbr.rel (%p527) target = $region64
      $region63: #{tpu_custom_call.1} parent=27 // pred_region
        %p530 = scmp.lt.s32.totalorder %s29, 1
        %s531 = scalar_select %p530, %s29, 1
        %s532 = smul.addr %s531, 4
        %s533 = smul.addr %s532, 4
        %s534 = scalar_lea.vmem %s11, %s533
      $region64: #{tpu_custom_call.1} parent=27 // pred_fallthru
        _
      // Predicated region
      $region65: #{tpu_custom_call.1} parent=27 // pred_check
        %p535 = pneg %p355
      $region66: #{tpu_custom_call.1} parent=27 // pred_check_branch
        %537 = sbr.rel (%p535) target = $region68
      $region67: #{tpu_custom_call.1} parent=27 // pred_region
        %p538 = scmp.lt.s32.totalorder %s29, 1
        %s539 = scalar_select %p538, %s29, 1
        %s540 = scalar_lea.vmem %s12, %s539
      $region68: #{tpu_custom_call.1} parent=27 // pred_fallthru
        _
      // Predicated region
      $region69: #{tpu_custom_call.1} parent=27 // pred_check
        %p541 = pneg %p381
      $region70: #{tpu_custom_call.1} parent=27 // pred_check_branch
        %543 = sbr.rel (%p541) target = $region72
      $region71: #{tpu_custom_call.1} parent=27 // pred_region
        %p544 = scmp.lt.s32.totalorder %s29, 1
        %s545 = scalar_select %p544, %s29, 1
        %s546 = smul.addr %s545, 8
        %s547 = smul.addr %s546, 4
        %s548 = scalar_lea.vmem %s13, %s547
      $region72: #{tpu_custom_call.1} parent=27 // pred_fallthru
        _
      // Predicated region
      $region73: #{tpu_custom_call.1} parent=27 // pred_check
        %p549 = pneg %p407
      $region74: #{tpu_custom_call.1} parent=27 // pred_check_branch
        %551 = sbr.rel (%p549) target = $region76
      $region75: #{tpu_custom_call.1} parent=27 // pred_region
        %p552 = scmp.lt.s32.totalorder %s29, 1
        %s553 = scalar_select %p552, %s29, 1
        %s554 = scalar_lea.vmem %s14, %s553
      $region76: #{tpu_custom_call.1} parent=27 // pred_fallthru
        _
    $region28: #{tpu_custom_call.1} parent=5 // pred_fallthru
      _
    %p555 = scmp.le.s32.totalorder 1, %s21
    %p556 = scmp.lt.s32.totalorder %s21, 3
    %p557 = pnand %p555, %p556
    %p558 = pneg %p557
    // Predicated region
    $region77: #{tpu_custom_call.1} parent=5 // pred_check
      _
    $region78: #{tpu_custom_call.1} parent=5 // pred_check_branch
      %560 = sbr.rel (%p557) target = $region80
    $region79: #{tpu_custom_call.1} parent=5 // pred_region
      %s561 = ssub.s32 %s21, 1
      %s562 = smul.u32 8, %s30
      %p563 = scmp.lt.s32.totalorder %s562, 7
      %s564 = scalar_select %p563, %s562, 7
      %s565 = smul.addr %s564, 8
      %s566 = scalar_lea.vmem %s0, %s565
      %p567 = pneg %p59
      %p568 = pneg %p56
      %p569 = pneg %p80
      %p570 = pneg %p77
      %p571 = pneg %p101
      %p572 = pneg %p98
      %p573 = scmp.lt.s32.totalorder %s31, 1
      %s574 = scalar_select %p573, %s31, 1
      %s575 = scalar_lea.vmem %s3, %s574
      %p576 = pneg %p127
      %p577 = pneg %p124
      %p578 = scmp.lt.s32.totalorder %s31, 1
      %s579 = scalar_select %p578, %s31, 1
      %s580 = scalar_lea.vmem %s4, %s579
      %p581 = pneg %p153
      %p582 = pneg %p150
      %p583 = scmp.lt.s32.totalorder %s31, 1
      %s584 = scalar_select %p583, %s31, 1
      %s585 = smul.addr %s584, 2
      %s586 = smul.addr %s585, 4
      %s587 = scalar_lea.vmem %s5, %s586
      %p588 = pneg %p179
      %p589 = pneg %p176
      %p590 = scmp.lt.s32.totalorder %s31, 1
      %s591 = scalar_select %p590, %s31, 1
      %s592 = smul.addr %s591, 2
      %s593 = smul.addr %s592, 8
      %s594 = scalar_lea.vmem %s6, %s593
      %p595 = pneg %p205
      %p596 = pneg %p202
      %p597 = scmp.lt.s32.totalorder %s31, 1
      %s598 = scalar_select %p597, %s31, 1
      %s599 = smul.addr %s598, 4
      %s600 = scalar_lea.vmem %s7, %s599
      %p601 = pneg %p231
      %p602 = pneg %p228
      %p603 = scmp.lt.s32.totalorder %s31, 1
      %s604 = scalar_select %p603, %s31, 1
      %s605 = smul.addr %s604, 8
      %s606 = scalar_lea.vmem %s8, %s605
      %p607 = pneg %p257
      %p608 = pneg %p254
      %p609 = scmp.lt.s32.totalorder %s31, 1
      %s610 = scalar_select %p609, %s31, 1
      %s611 = scalar_lea.vmem %s9, %s610
      %p612 = pneg %p283
      %p613 = pneg %p280
      %p614 = scmp.lt.s32.totalorder %s31, 1
      %s615 = scalar_select %p614, %s31, 1
      %s616 = scalar_lea.vmem %s10, %s615
      %p617 = pneg %p309
      %p618 = pneg %p306
      %p619 = scmp.lt.s32.totalorder %s31, 1
      %s620 = scalar_select %p619, %s31, 1
      %s621 = smul.addr %s620, 4
      %s622 = smul.addr %s621, 4
      %s623 = scalar_lea.vmem %s11, %s622
      %p624 = pneg %p335
      %p625 = pneg %p332
      %p626 = scmp.lt.s32.totalorder %s31, 1
      %s627 = scalar_select %p626, %s31, 1
      %s628 = scalar_lea.vmem %s12, %s627
      %p629 = pneg %p361
      %p630 = pneg %p358
      %p631 = scmp.lt.s32.totalorder %s31, 1
      %s632 = scalar_select %p631, %s31, 1
      %s633 = smul.addr %s632, 8
      %s634 = smul.addr %s633, 4
      %s635 = scalar_lea.vmem %s13, %s634
      %p636 = pneg %p387
      %p637 = pneg %p384
      %p638 = scmp.lt.s32.totalorder %s31, 1
      %s639 = scalar_select %p638, %s31, 1
      %s640 = scalar_lea.vmem %s14, %s639
      %p641 = pneg %p413
      %p642 = pneg %p410
      %p643 = pneg %p439
      %p644 = pneg %p436
      %s645 = smul.u32 8, %s30
      %p646 = scmp.lt.s32.totalorder %s645, 7
      %s647 = scalar_select %p646, %s645, 7
      %s648 = smul.addr %s647, 8
      %s649 = scalar_lea.vmem %s15, %s648
      %s650 = smul.u32 8, %s30
      %p651 = scmp.lt.s32.totalorder %s650, 7
      %s652 = scalar_select %p651, %s650, 7
      %s653 = smul.addr %s652, 8
      %s654 = scalar_lea.vmem %s0, %s653
      %s655 = smul.u32 8, %s30
      %p656 = scmp.lt.s32.totalorder %s31, 1
      %s657 = scalar_select %p656, %s31, 1
      %s658 = scalar_lea.vmem %s3, %s657
      %p659 = scmp.lt.s32.totalorder %s31, 1
      %s660 = scalar_select %p659, %s31, 1
      %s661 = scalar_lea.vmem %s4, %s660
      %p662 = scmp.lt.s32.totalorder %s31, 1
      %s663 = scalar_select %p662, %s31, 1
      %s664 = smul.addr %s663, 2
      %s665 = smul.addr %s664, 4
      %s666 = scalar_lea.vmem %s5, %s665
      %p667 = scmp.lt.s32.totalorder %s31, 1
      %s668 = scalar_select %p667, %s31, 1
      %s669 = smul.addr %s668, 2
      %s670 = smul.addr %s669, 8
      %s671 = scalar_lea.vmem %s6, %s670
      %p672 = scmp.lt.s32.totalorder %s31, 1
      %s673 = scalar_select %p672, %s31, 1
      %s674 = smul.addr %s673, 4
      %s675 = scalar_lea.vmem %s7, %s674
      %p676 = scmp.lt.s32.totalorder %s31, 1
      %s677 = scalar_select %p676, %s31, 1
      %s678 = smul.addr %s677, 8
      %s679 = scalar_lea.vmem %s8, %s678
      %p680 = scmp.lt.s32.totalorder %s31, 1
      %s681 = scalar_select %p680, %s31, 1
      %s682 = scalar_lea.vmem %s9, %s681
      %p683 = scmp.lt.s32.totalorder %s31, 1
      %s684 = scalar_select %p683, %s31, 1
      %s685 = scalar_lea.vmem %s10, %s684
      %p686 = scmp.lt.s32.totalorder %s31, 1
      %s687 = scalar_select %p686, %s31, 1
      %s688 = smul.addr %s687, 4
      %s689 = smul.addr %s688, 4
      %s690 = scalar_lea.vmem %s11, %s689
      %p691 = scmp.lt.s32.totalorder %s31, 1
      %s692 = scalar_select %p691, %s31, 1
      %s693 = scalar_lea.vmem %s12, %s692
      %p694 = scmp.lt.s32.totalorder %s31, 1
      %s695 = scalar_select %p694, %s31, 1
      %s696 = smul.addr %s695, 8
      %s697 = smul.addr %s696, 4
      %s698 = scalar_lea.vmem %s13, %s697
      %p699 = scmp.lt.s32.totalorder %s31, 1
      %s700 = scalar_select %p699, %s31, 1
      %s701 = scalar_lea.vmem %s14, %s700
      %s702 = smul.u32 8, %s30
      %p703 = scmp.lt.s32.totalorder %s702, 7
      %s704 = scalar_select %p703, %s702, 7
      %s705 = smul.addr %s704, 8
      %s706 = scalar_lea.vmem %s15, %s705
      %s707 = smul.u32 8, %s30
      %p709 = scmp.eq.s32.totalorder %s31, 0
      // Predicated region
      $region81: #{tpu_custom_call.1} parent=79 // pred_check
        %p710 = pneg %p709
      $region82: #{tpu_custom_call.1} parent=79 // pred_check_branch
        %712 = sbr.rel (%p710) target = $region84
      $region83: #{tpu_custom_call.1} parent=79 // pred_region
        %v713 = vld [vmem:[%s654] sm:$0xff]
        %v714 = vld [vmem:[%s654 + $0x8] sm:$0xff]
        %v715 = vld [vmem:[%s654 + $0x10] sm:$0xff]
        %v716 = vld [vmem:[%s654 + $0x18] sm:$0xff]
        %v717 = vld [vmem:[%s654 + $0x20] sm:$0xff]
        %v718 = vld [vmem:[%s654 + $0x28] sm:$0xff]
        %v719 = vld [vmem:[%s654 + $0x30] sm:$0xff]
        %v720 = vld [vmem:[%s654 + $0x38] sm:$0xff]
        %v721 = vpack.c.bf16 %v714, %v713
        %v722 = vpack.c.bf16 %v716, %v715
        %v723 = vpack.c.bf16 %v718, %v717
        %v724 = vpack.c.bf16 %v720, %v719
        %v725 = vld [vmem:[%s1] sm:$0xf]
        %v726 = vld [vmem:[%s1 + $0x4] sm:$0xf]
        %v727 = vld [vmem:[%s2] sm:$0x1]
        %v729 = vperm.slane %v727, 0
        %v733 = vunpack.c.l.b16 %v725
        %v734 = vunpack.c.l.b16 %v726
        %v735 = vpack.c.b16 %v734, %v733
        %vm737 = vcmask 130048
        %v739 = vsel %vm737, %v721, 0
        %v742 = vsel %vm737, %v722, 0
        %v745 = vsel %vm737, %v723, 0
        %v748 = vsel %vm737, %v724, 0
        %750 = vmatpush.bf16.msra.mxu0 0
        %751 = vmatpush.bf16.msra.mxu0 0
        %752 = vmatpush.bf16.msra.mxu0 0
        %753 = vmatpush.bf16.msra.mxu0 0
        %754 = vmatpush.bf16.msra.mxu0 0
        %755 = vmatpush.bf16.msra.mxu0 0
        %756 = vmatpush.bf16.msra.mxu0 0
        %757 = vmatpush.bf16.msra.mxu0 %v735
        %758 = vmatmul.bf16.gmra.mxu0 %v739
        %v759 = vpop.f32.mrf.mxu0
        %v760 = vadd.f32 %v729, %v759
        %v761 = vpop.f32.mrf.mxu0
        %v762 = vadd.f32 %v729, %v761
        %763 = vmatmul.bf16.gmra.mxu0 %v742
        %v764 = vpop.f32.mrf.mxu0
        %v765 = vadd.f32 %v729, %v764
        %v766 = vpop.f32.mrf.mxu0
        %v767 = vadd.f32 %v729, %v766
        %768 = vmatmul.bf16.gmra.mxu0 %v745
        %v769 = vpop.f32.mrf.mxu0
        %v770 = vadd.f32 %v729, %v769
        %v771 = vpop.f32.mrf.mxu0
        %v772 = vadd.f32 %v729, %v771
        %773 = vmatmul.bf16.gmra.mxu0 %v748
        %v774 = vpop.f32.mrf.mxu0
        %v775 = vadd.f32 %v729, %v774
        %v776 = vpop.f32.mrf.mxu0
        %v777 = vadd.f32 %v729, %v776
        %778 = vdwg.mxu0
        %vm779 = vcmask 261120
        %780 = vst.msk [vmem:[%s706] sm:$0xff] %vm779, %v760
        %781 = vst.msk [vmem:[%s706 + $0x8] sm:$0xff] %vm779, %v762
        %782 = vst.msk [vmem:[%s706 + $0x10] sm:$0xff] %vm779, %v765
        %783 = vst.msk [vmem:[%s706 + $0x18] sm:$0xff] %vm779, %v767
        %784 = vst.msk [vmem:[%s706 + $0x20] sm:$0xff] %vm779, %v770
        %785 = vst.msk [vmem:[%s706 + $0x28] sm:$0xff] %vm779, %v772
        %786 = vst.msk [vmem:[%s706 + $0x30] sm:$0xff] %vm779, %v775
        %787 = vst.msk [vmem:[%s706 + $0x38] sm:$0xff] %vm779, %v777
      $region84: #{tpu_custom_call.1} parent=79 // pred_fallthru
        _
      %v788 = vld [vmem:[%s706] sm:$0xff]
      %v789 = vld [vmem:[%s706 + $0x8] sm:$0xff]
      %v790 = vld [vmem:[%s706 + $0x10] sm:$0xff]
      %v791 = vld [vmem:[%s706 + $0x18] sm:$0xff]
      %v792 = vld [vmem:[%s706 + $0x20] sm:$0xff]
      %v793 = vld [vmem:[%s706 + $0x28] sm:$0xff]
      %v794 = vld [vmem:[%s706 + $0x30] sm:$0xff]
      %v795 = vld [vmem:[%s706 + $0x38] sm:$0xff]
      %v796 = vld [vmem:[%s658] sm:$0x1]
      %v797 = vld [vmem:[%s661] sm:$0x1]
      %v798 = vld [vmem:[%s682] sm:$0x1]
      %v799 = vld [vmem:[%s685] sm:$0x1]
      %v800 = vld [vmem:[%s666] sm:$0xf]
      %v801 = vld [vmem:[%s666 + $0x4] sm:$0xf]
      %v802 = vld [vmem:[%s671] sm:$0xff]
      %v803 = vld [vmem:[%s671 + $0x8] sm:$0xff]
      %v804 = vld [vmem:[%s675] sm:$0xf]
      %v805 = vld [vmem:[%s679] sm:$0xff]
      %v806 = vld [vmem:[%s690] sm:$0xf]
      %v807 = vld [vmem:[%s690 + $0x4] sm:$0xf]
      %v808 = vld [vmem:[%s690 + $0x8] sm:$0xf]
      %v809 = vld [vmem:[%s690 + $0xc] sm:$0xf]
      %v810 = vld [vmem:[%s693] sm:$0x1]
      %v811 = vld [vmem:[%s698] sm:$0xf]
      %v812 = vld [vmem:[%s698 + $0x4] sm:$0xf]
      %v813 = vld [vmem:[%s698 + $0x8] sm:$0xf]
      %v814 = vld [vmem:[%s698 + $0xc] sm:$0xf]
      %v815 = vld [vmem:[%s698 + $0x10] sm:$0xf]
      %v816 = vld [vmem:[%s698 + $0x14] sm:$0xf]
      %v817 = vld [vmem:[%s698 + $0x18] sm:$0xf]
      %v818 = vld [vmem:[%s698 + $0x1c] sm:$0xf]
      %v819 = vld [vmem:[%s701] sm:$0x1]
      %vm820 = vcmask 261120
      %v821 = vsel %vm820, %v788, 0.0
      %822 = vadd.xlane.f32.xlu0 %v821
      %v823 = vpop.xlane.xlu0 %822
      %v824 = vsel %vm820, %v789, 0.0
      %825 = vadd.xlane.f32.xlu0 %v824
      %v826 = vpop.xlane.xlu0 %825
      %v827 = vsel %vm820, %v790, 0.0
      %828 = vadd.xlane.f32.xlu0 %v827
      %v829 = vpop.xlane.xlu0 %828
      %v830 = vsel %vm820, %v791, 0.0
      %831 = vadd.xlane.f32.xlu0 %v830
      %v832 = vpop.xlane.xlu0 %831
      %v833 = vsel %vm820, %v792, 0.0
      %834 = vadd.xlane.f32.xlu0 %v833
      %v835 = vpop.xlane.xlu0 %834
      %v836 = vsel %vm820, %v793, 0.0
      %837 = vadd.xlane.f32.xlu0 %v836
      %v838 = vpop.xlane.xlu0 %837
      %v839 = vsel %vm820, %v794, 0.0
      %840 = vadd.xlane.f32.xlu0 %v839
      %v841 = vpop.xlane.xlu0 %840
      %v842 = vsel %vm820, %v795, 0.0
      %843 = vadd.xlane.f32.xlu0 %v842
      %v844 = vpop.xlane.xlu0 %843
      %v845 = vrcp.pop 32.0
      %v846 = vmul.f32 32.0, %v845
      %v847 = vsub.f32 1.0, %v846
      %v848 = vmul.f32 %v845, %v847
      %v849 = vadd.f32 %v845, %v848
      %vm850 = vweird.f32 %v845
      %v851 = vsel %vm850, %v845, %v849
      %v852 = vmul.f32 %v823, %v851
      %v853 = vmul.f32 %v826, %v851
      %v854 = vmul.f32 %v829, %v851
      %v855 = vmul.f32 %v832, %v851
      %v856 = vmul.f32 %v835, %v851
      %v857 = vmul.f32 %v838, %v851
      %v858 = vmul.f32 %v841, %v851
      %v859 = vmul.f32 %v844, %v851
      %v860 = vsub.f32 %v788, %v852
      %v861 = vsub.f32 %v789, %v853
      %v862 = vsub.f32 %v790, %v854
      %v863 = vsub.f32 %v791, %v855
      %v864 = vsub.f32 %v792, %v856
      %v865 = vsub.f32 %v793, %v857
      %v866 = vsub.f32 %v794, %v858
      %v867 = vsub.f32 %v795, %v859
      %v868 = vmul.f32 %v860, %v860
      %v869 = vmul.f32 %v861, %v861
      %v870 = vmul.f32 %v862, %v862
      %v871 = vmul.f32 %v863, %v863
      %v872 = vmul.f32 %v864, %v864
      %v873 = vmul.f32 %v865, %v865
      %v874 = vmul.f32 %v866, %v866
      %v875 = vmul.f32 %v867, %v867
      %v876 = vsel %vm820, %v868, 0.0
      %877 = vadd.xlane.f32.xlu0 %v876
      %v878 = vpop.xlane.xlu0 %877
      %v879 = vsel %vm820, %v869, 0.0
      %880 = vadd.xlane.f32.xlu0 %v879
      %v881 = vpop.xlane.xlu0 %880
      %v882 = vsel %vm820, %v870, 0.0
      %883 = vadd.xlane.f32.xlu0 %v882
      %v884 = vpop.xlane.xlu0 %883
      %v885 = vsel %vm820, %v871, 0.0
      %886 = vadd.xlane.f32.xlu0 %v885
      %v887 = vpop.xlane.xlu0 %886
      %v888 = vsel %vm820, %v872, 0.0
      %889 = vadd.xlane.f32.xlu0 %v888
      %v890 = vpop.xlane.xlu0 %889
      %v891 = vsel %vm820, %v873, 0.0
      %892 = vadd.xlane.f32.xlu0 %v891
      %v893 = vpop.xlane.xlu0 %892
      %v894 = vsel %vm820, %v874, 0.0
      %895 = vadd.xlane.f32.xlu0 %v894
      %v896 = vpop.xlane.xlu0 %895
      %v897 = vsel %vm820, %v875, 0.0
      %898 = vadd.xlane.f32.xlu0 %v897
      %v899 = vpop.xlane.xlu0 %898
      %v900 = vmul.f32 %v878, %v851
      %v901 = vmul.f32 %v881, %v851
      %v902 = vmul.f32 %v884, %v851
      %v903 = vmul.f32 %v887, %v851
      %v904 = vmul.f32 %v890, %v851
      %v905 = vmul.f32 %v893, %v851
      %v906 = vmul.f32 %v896, %v851
      %v907 = vmul.f32 %v899, %v851
      %v908 = vadd.f32 %v900, 1e-05
      %v909 = vadd.f32 %v901, 1e-05
      %v910 = vadd.f32 %v902, 1e-05
      %v911 = vadd.f32 %v903, 1e-05
      %v912 = vadd.f32 %v904, 1e-05
      %v913 = vadd.f32 %v905, 1e-05
      %v914 = vadd.f32 %v906, 1e-05
      %v915 = vadd.f32 %v907, 1e-05
      %v916 = vrsqrt.pop %v908
      %v917 = vmul.f32 %v916, %v908
      %v918 = vmul.f32 %v917, %v916
      %v919 = vmul.f32 0.5, %v918
      %v920 = vsub.f32 1.5, %v919
      %v921 = vmul.f32 %v916, %v920
      %vm922 = vweird.f32 %v908
      %vm923 = vweird.f32 %v916
      %vm924 = vmor %vm922, %vm923
      %v925 = vsel %vm924, %v916, %v921
      %v926 = vrsqrt.pop %v909
      %v927 = vmul.f32 %v926, %v909
      %v928 = vmul.f32 %v927, %v926
      %v929 = vmul.f32 0.5, %v928
      %v930 = vsub.f32 1.5, %v929
      %v931 = vmul.f32 %v926, %v930
      %vm932 = vweird.f32 %v909
      %vm933 = vweird.f32 %v926
      %vm934 = vmor %vm932, %vm933
      %v935 = vsel %vm934, %v926, %v931
      %v936 = vrsqrt.pop %v910
      %v937 = vmul.f32 %v936, %v910
      %v938 = vmul.f32 %v937, %v936
      %v939 = vmul.f32 0.5, %v938
      %v940 = vsub.f32 1.5, %v939
      %v941 = vmul.f32 %v936, %v940
      %vm942 = vweird.f32 %v910
      %vm943 = vweird.f32 %v936
      %vm944 = vmor %vm942, %vm943
      %v945 = vsel %vm944, %v936, %v941
      %v946 = vrsqrt.pop %v911
      %v947 = vmul.f32 %v946, %v911
      %v948 = vmul.f32 %v947, %v946
      %v949 = vmul.f32 0.5, %v948
      %v950 = vsub.f32 1.5, %v949
      %v951 = vmul.f32 %v946, %v950
      %vm952 = vweird.f32 %v911
      %vm953 = vweird.f32 %v946
      %vm954 = vmor %vm952, %vm953
      %v955 = vsel %vm954, %v946, %v951
      %v956 = vrsqrt.pop %v912
      %v957 = vmul.f32 %v956, %v912
      %v958 = vmul.f32 %v957, %v956
      %v959 = vmul.f32 0.5, %v958
      %v960 = vsub.f32 1.5, %v959
      %v961 = vmul.f32 %v956, %v960
      %vm962 = vweird.f32 %v912
      %vm963 = vweird.f32 %v956
      %vm964 = vmor %vm962, %vm963
      %v965 = vsel %vm964, %v956, %v961
      %v966 = vrsqrt.pop %v913
      %v967 = vmul.f32 %v966, %v913
      %v968 = vmul.f32 %v967, %v966
      %v969 = vmul.f32 0.5, %v968
      %v970 = vsub.f32 1.5, %v969
      %v971 = vmul.f32 %v966, %v970
      %vm972 = vweird.f32 %v913
      %vm973 = vweird.f32 %v966
      %vm974 = vmor %vm972, %vm973
      %v975 = vsel %vm974, %v966, %v971
      %v976 = vrsqrt.pop %v914
      %v977 = vmul.f32 %v976, %v914
      %v978 = vmul.f32 %v977, %v976
      %v979 = vmul.f32 0.5, %v978
      %v980 = vsub.f32 1.5, %v979
      %v981 = vmul.f32 %v976, %v980
      %vm982 = vweird.f32 %v914
      %vm983 = vweird.f32 %v976
      %vm984 = vmor %vm982, %vm983
      %v985 = vsel %vm984, %v976, %v981
      %v986 = vrsqrt.pop %v915
      %v987 = vmul.f32 %v986, %v915
      %v988 = vmul.f32 %v987, %v986
      %v989 = vmul.f32 0.5, %v988
      %v990 = vsub.f32 1.5, %v989
      %v991 = vmul.f32 %v986, %v990
      %vm992 = vweird.f32 %v915
      %vm993 = vweird.f32 %v986
      %vm994 = vmor %vm992, %vm993
      %v995 = vsel %vm994, %v986, %v991
      %v996 = vmul.f32 %v860, %v925
      %v997 = vmul.f32 %v861, %v935
      %v998 = vmul.f32 %v862, %v945
      %v999 = vmul.f32 %v863, %v955
      %v1000 = vmul.f32 %v864, %v965
      %v1001 = vmul.f32 %v865, %v975
      %v1002 = vmul.f32 %v866, %v985
      %v1003 = vmul.f32 %v867, %v995
      %v1005 = vperm.slane %v796, 0
      %v1007 = vmul.f32 %v996, %v1005
      %v1008 = vmul.f32 %v997, %v1005
      %v1009 = vmul.f32 %v998, %v1005
      %v1010 = vmul.f32 %v999, %v1005
      %v1011 = vmul.f32 %v1000, %v1005
      %v1012 = vmul.f32 %v1001, %v1005
      %v1013 = vmul.f32 %v1002, %v1005
      %v1014 = vmul.f32 %v1003, %v1005
      %v1016 = vperm.slane %v797, 0
      %v1018 = vadd.f32 %v1007, %v1016
      %v1019 = vadd.f32 %v1008, %v1016
      %v1020 = vadd.f32 %v1009, %v1016
      %v1021 = vadd.f32 %v1010, %v1016
      %v1022 = vadd.f32 %v1011, %v1016
      %v1023 = vadd.f32 %v1012, %v1016
      %v1024 = vadd.f32 %v1013, %v1016
      %v1025 = vadd.f32 %v1014, %v1016
      %v1026 = vpack.c.bf16 %v1018, %v1018
      %v1027 = vpack.c.bf16 %v1019, %v1019
      %v1028 = vpack.c.bf16 %v1020, %v1020
      %v1029 = vpack.c.bf16 %v1021, %v1021
      %v1030 = vpack.c.bf16 %v1022, %v1022
      %v1031 = vpack.c.bf16 %v1023, %v1023
      %v1032 = vpack.c.bf16 %v1024, %v1024
      %v1033 = vpack.c.bf16 %v1025, %v1025
      %1035 = vset.pattern.permute.xlu0 0
      %1036 = vperm.xlu0 %1035, %v802
      %v1037 = vpop.permute.xlu0 %1036
      %1040 = vset.pattern.permute.xlu0 0
      %1041 = vperm.xlu0 %1040, %v803
      %v1042 = vpop.permute.xlu0 %1041
      %v1046 = vunpack.c.l.b16 %v800
      %v1047 = vunpack.c.l.b16 %v801
      %v1048 = vpack.c.b16 %v1047, %v1046
      %vm1049 = vcmask 64512
      %v1051 = vsel %vm1049, %v1048, 0
      %vm1053 = vcmask 1043456
      %v1055 = vsel %vm1053, %v1026, 0
      %1057 = vmatpush.bf16.msra.mxu0 0
      %1058 = vmatpush.bf16.msra.mxu0 0
      %1059 = vmatpush.bf16.msra.mxu0 0
      %1060 = vmatpush.bf16.msra.mxu0 0
      %1061 = vmatpush.bf16.msra.mxu0 0
      %1062 = vmatpush.bf16.msra.mxu0 0
      %1063 = vmatpush.bf16.msra.mxu0 0
      %1064 = vmatpush.bf16.msra.mxu0 %v1055
      %1065 = vmatmul.bf16.gmra.mxu0 %v1051
      %v1066 = vpop.f32.mrf.mxu0
      %v1067 = vadd.f32 %v1037, %v1066
      %v1068 = vpop.f32.mrf.mxu0
      %v1069 = vadd.f32 %v1042, %v1068
      %1070 = vdwg.mxu0
      %v1071 = vmul.f32 %v1067, %v1067
      %v1072 = vmul.f32 %v1069, %v1069
      %v1073 = vmul.f32 %v1067, %v1071
      %v1074 = vmul.f32 %v1069, %v1072
      %v1075 = vmul.f32 %v1073, 0.044715
      %v1076 = vmul.f32 %v1074, 0.044715
      %v1077 = vadd.f32 %v1067, %v1075
      %v1078 = vadd.f32 %v1069, %v1076
      %v1079 = vmul.f32 %v1077, 0.7978846
      %v1080 = vmul.f32 %v1078, 0.7978846
      %v1081 = vtanh.pop %v1079
      %v1082 = vtanh.pop %v1080
      %v1083 = vadd.f32 %v1081, 1.0
      %v1084 = vadd.f32 %v1082, 1.0
      %v1085 = vmul.f32 %v1083, 0.5
      %v1086 = vmul.f32 %v1084, 0.5
      %v1087 = vmul.f32 %v1067, %v1085
      %v1088 = vmul.f32 %v1069, %v1086
      %v1089 = vpack.c.bf16 %v1088, %v1087
      %1091 = vset.pattern.permute.xlu0 0
      %1092 = vperm.xlu0 %1091, %v805
      %v1093 = vpop.permute.xlu0 %1092
      %vm1095 = vcmask 130048
      %v1097 = vsel %vm1095, %v804, 0
      %1099 = vmatpush.bf16.msra.mxu0 0
      %1100 = vmatpush.bf16.msra.mxu0 0
      %1101 = vmatpush.bf16.msra.mxu0 0
      %1102 = vmatpush.bf16.msra.mxu0 0
      %1103 = vmatpush.bf16.msra.mxu0 0
      %1104 = vmatpush.bf16.msra.mxu0 0
      %1105 = vmatpush.bf16.msra.mxu0 0
      %1106 = vmatpush.bf16.msra.mxu0 %v1089
      %1107 = vmatmul.bf16.gmra.mxu0 %v1097
      %v1108 = vpop.f32.mrf.mxu0
      %v1109 = vadd.f32 %v1093, %v1108
      %v1110 = vpop.f32.mrf.mxu0
      %1111 = vdwg.mxu0
      %v1113 = vsel %vm1053, %v1027, 0
      %1115 = vmatpush.bf16.msra.mxu0 0
      %1116 = vmatpush.bf16.msra.mxu0 0
      %1117 = vmatpush.bf16.msra.mxu0 0
      %1118 = vmatpush.bf16.msra.mxu0 0
      %1119 = vmatpush.bf16.msra.mxu0 0
      %1120 = vmatpush.bf16.msra.mxu0 0
      %1121 = vmatpush.bf16.msra.mxu0 0
      %1122 = vmatpush.bf16.msra.mxu0 %v1113
      %1123 = vmatmul.bf16.gmra.mxu0 %v1051
      %v1124 = vpop.f32.mrf.mxu0
      %v1125 = vadd.f32 %v1037, %v1124
      %v1126 = vpop.f32.mrf.mxu0
      %v1127 = vadd.f32 %v1042, %v1126
      %1128 = vdwg.mxu0
      %v1129 = vmul.f32 %v1125, %v1125
      %v1130 = vmul.f32 %v1127, %v1127
      %v1131 = vmul.f32 %v1125, %v1129
      %v1132 = vmul.f32 %v1127, %v1130
      %v1133 = vmul.f32 %v1131, 0.044715
      %v1134 = vmul.f32 %v1132, 0.044715
      %v1135 = vadd.f32 %v1125, %v1133
      %v1136 = vadd.f32 %v1127, %v1134
      %v1137 = vmul.f32 %v1135, 0.7978846
      %v1138 = vmul.f32 %v1136, 0.7978846
      %v1139 = vtanh.pop %v1137
      %v1140 = vtanh.pop %v1138
      %v1141 = vadd.f32 %v1139, 1.0
      %v1142 = vadd.f32 %v1140, 1.0
      %v1143 = vmul.f32 %v1141, 0.5
      %v1144 = vmul.f32 %v1142, 0.5
      %v1145 = vmul.f32 %v1125, %v1143
      %v1146 = vmul.f32 %v1127, %v1144
      %v1147 = vpack.c.bf16 %v1146, %v1145
      %1148 = vmatpush.bf16.msra.mxu0 0
      %1149 = vmatpush.bf16.msra.mxu0 0
      %1150 = vmatpush.bf16.msra.mxu0 0
      %1151 = vmatpush.bf16.msra.mxu0 0
      %1152 = vmatpush.bf16.msra.mxu0 0
      %1153 = vmatpush.bf16.msra.mxu0 0
      %1154 = vmatpush.bf16.msra.mxu0 0
      %1155 = vmatpush.bf16.msra.mxu0 %v1147
      %1156 = vmatmul.bf16.gmra.mxu0 %v1097
      %v1157 = vpop.f32.mrf.mxu0
      %v1158 = vadd.f32 %v1093, %v1157
      %v1159 = vpop.f32.mrf.mxu0
      %1160 = vdwg.mxu0
      %v1162 = vsel %vm1053, %v1028, 0
      %1164 = vmatpush.bf16.msra.mxu0 0
      %1165 = vmatpush.bf16.msra.mxu0 0
      %1166 = vmatpush.bf16.msra.mxu0 0
      %1167 = vmatpush.bf16.msra.mxu0 0
      %1168 = vmatpush.bf16.msra.mxu0 0
      %1169 = vmatpush.bf16.msra.mxu0 0
      %1170 = vmatpush.bf16.msra.mxu0 0
      %1171 = vmatpush.bf16.msra.mxu0 %v1162
      %1172 = vmatmul.bf16.gmra.mxu0 %v1051
      %v1173 = vpop.f32.mrf.mxu0
      %v1174 = vadd.f32 %v1037, %v1173
      %v1175 = vpop.f32.mrf.mxu0
      %v1176 = vadd.f32 %v1042, %v1175
      %1177 = vdwg.mxu0
      %v1178 = vmul.f32 %v1174, %v1174
      %v1179 = vmul.f32 %v1176, %v1176
      %v1180 = vmul.f32 %v1174, %v1178
      %v1181 = vmul.f32 %v1176, %v1179
      %v1182 = vmul.f32 %v1180, 0.044715
      %v1183 = vmul.f32 %v1181, 0.044715
      %v1184 = vadd.f32 %v1174, %v1182
      %v1185 = vadd.f32 %v1176, %v1183
      %v1186 = vmul.f32 %v1184, 0.7978846
      %v1187 = vmul.f32 %v1185, 0.7978846
      %v1188 = vtanh.pop %v1186
      %v1189 = vtanh.pop %v1187
      %v1190 = vadd.f32 %v1188, 1.0
      %v1191 = vadd.f32 %v1189, 1.0
      %v1192 = vmul.f32 %v1190, 0.5
      %v1193 = vmul.f32 %v1191, 0.5
      %v1194 = vmul.f32 %v1174, %v1192
      %v1195 = vmul.f32 %v1176, %v1193
      %v1196 = vpack.c.bf16 %v1195, %v1194
      %1197 = vmatpush.bf16.msra.mxu0 0
      %1198 = vmatpush.bf16.msra.mxu0 0
      %1199 = vmatpush.bf16.msra.mxu0 0
      %1200 = vmatpush.bf16.msra.mxu0 0
      %1201 = vmatpush.bf16.msra.mxu0 0
      %1202 = vmatpush.bf16.msra.mxu0 0
      %1203 = vmatpush.bf16.msra.mxu0 0
      %1204 = vmatpush.bf16.msra.mxu0 %v1196
      %1205 = vmatmul.bf16.gmra.mxu0 %v1097
      %v1206 = vpop.f32.mrf.mxu0
      %v1207 = vadd.f32 %v1093, %v1206
      %v1208 = vpop.f32.mrf.mxu0
      %1209 = vdwg.mxu0
      %v1211 = vsel %vm1053, %v1029, 0
      %1213 = vmatpush.bf16.msra.mxu0 0
      %1214 = vmatpush.bf16.msra.mxu0 0
      %1215 = vmatpush.bf16.msra.mxu0 0
      %1216 = vmatpush.bf16.msra.mxu0 0
      %1217 = vmatpush.bf16.msra.mxu0 0
      %1218 = vmatpush.bf16.msra.mxu0 0
      %1219 = vmatpush.bf16.msra.mxu0 0
      %1220 = vmatpush.bf16.msra.mxu0 %v1211
      %1221 = vmatmul.bf16.gmra.mxu0 %v1051
      %v1222 = vpop.f32.mrf.mxu0
      %v1223 = vadd.f32 %v1037, %v1222
      %v1224 = vpop.f32.mrf.mxu0
      %v1225 = vadd.f32 %v1042, %v1224
      %1226 = vdwg.mxu0
      %v1227 = vmul.f32 %v1223, %v1223
      %v1228 = vmul.f32 %v1225, %v1225
      %v1229 = vmul.f32 %v1223, %v1227
      %v1230 = vmul.f32 %v1225, %v1228
      %v1231 = vmul.f32 %v1229, 0.044715
      %v1232 = vmul.f32 %v1230, 0.044715
      %v1233 = vadd.f32 %v1223, %v1231
      %v1234 = vadd.f32 %v1225, %v1232
      %v1235 = vmul.f32 %v1233, 0.7978846
      %v1236 = vmul.f32 %v1234, 0.7978846
      %v1237 = vtanh.pop %v1235
      %v1238 = vtanh.pop %v1236
      %v1239 = vadd.f32 %v1237, 1.0
      %v1240 = vadd.f32 %v1238, 1.0
      %v1241 = vmul.f32 %v1239, 0.5
      %v1242 = vmul.f32 %v1240, 0.5
      %v1243 = vmul.f32 %v1223, %v1241
      %v1244 = vmul.f32 %v1225, %v1242
      %v1245 = vpack.c.bf16 %v1244, %v1243
      %1246 = vmatpush.bf16.msra.mxu0 0
      %1247 = vmatpush.bf16.msra.mxu0 0
      %1248 = vmatpush.bf16.msra.mxu0 0
      %1249 = vmatpush.bf16.msra.mxu0 0
      %1250 = vmatpush.bf16.msra.mxu0 0
      %1251 = vmatpush.bf16.msra.mxu0 0
      %1252 = vmatpush.bf16.msra.mxu0 0
      %1253 = vmatpush.bf16.msra.mxu0 %v1245
      %1254 = vmatmul.bf16.gmra.mxu0 %v1097
      %v1255 = vpop.f32.mrf.mxu0
      %v1256 = vadd.f32 %v1093, %v1255
      %v1257 = vpop.f32.mrf.mxu0
      %1258 = vdwg.mxu0
      %v1260 = vsel %vm1053, %v1030, 0
      %1262 = vmatpush.bf16.msra.mxu0 0
      %1263 = vmatpush.bf16.msra.mxu0 0
      %1264 = vmatpush.bf16.msra.mxu0 0
      %1265 = vmatpush.bf16.msra.mxu0 0
      %1266 = vmatpush.bf16.msra.mxu0 0
      %1267 = vmatpush.bf16.msra.mxu0 0
      %1268 = vmatpush.bf16.msra.mxu0 0
      %1269 = vmatpush.bf16.msra.mxu0 %v1260
      %1270 = vmatmul.bf16.gmra.mxu0 %v1051
      %v1271 = vpop.f32.mrf.mxu0
      %v1272 = vadd.f32 %v1037, %v1271
      %v1273 = vpop.f32.mrf.mxu0
      %v1274 = vadd.f32 %v1042, %v1273
      %1275 = vdwg.mxu0
      %v1276 = vmul.f32 %v1272, %v1272
      %v1277 = vmul.f32 %v1274, %v1274
      %v1278 = vmul.f32 %v1272, %v1276
      %v1279 = vmul.f32 %v1274, %v1277
      %v1280 = vmul.f32 %v1278, 0.044715
      %v1281 = vmul.f32 %v1279, 0.044715
      %v1282 = vadd.f32 %v1272, %v1280
      %v1283 = vadd.f32 %v1274, %v1281
      %v1284 = vmul.f32 %v1282, 0.7978846
      %v1285 = vmul.f32 %v1283, 0.7978846
      %v1286 = vtanh.pop %v1284
      %v1287 = vtanh.pop %v1285
      %v1288 = vadd.f32 %v1286, 1.0
      %v1289 = vadd.f32 %v1287, 1.0
      %v1290 = vmul.f32 %v1288, 0.5
      %v1291 = vmul.f32 %v1289, 0.5
      %v1292 = vmul.f32 %v1272, %v1290
      %v1293 = vmul.f32 %v1274, %v1291
      %v1294 = vpack.c.bf16 %v1293, %v1292
      %1295 = vmatpush.bf16.msra.mxu0 0
      %1296 = vmatpush.bf16.msra.mxu0 0
      %1297 = vmatpush.bf16.msra.mxu0 0
      %1298 = vmatpush.bf16.msra.mxu0 0
      %1299 = vmatpush.bf16.msra.mxu0 0
      %1300 = vmatpush.bf16.msra.mxu0 0
      %1301 = vmatpush.bf16.msra.mxu0 0
      %1302 = vmatpush.bf16.msra.mxu0 %v1294
      %1303 = vmatmul.bf16.gmra.mxu0 %v1097
      %v1304 = vpop.f32.mrf.mxu0
      %v1305 = vadd.f32 %v1093, %v1304
      %v1306 = vpop.f32.mrf.mxu0
      %1307 = vdwg.mxu0
      %v1309 = vsel %vm1053, %v1031, 0
      %1311 = vmatpush.bf16.msra.mxu0 0
      %1312 = vmatpush.bf16.msra.mxu0 0
      %1313 = vmatpush.bf16.msra.mxu0 0
      %1314 = vmatpush.bf16.msra.mxu0 0
      %1315 = vmatpush.bf16.msra.mxu0 0
      %1316 = vmatpush.bf16.msra.mxu0 0
      %1317 = vmatpush.bf16.msra.mxu0 0
      %1318 = vmatpush.bf16.msra.mxu0 %v1309
      %1319 = vmatmul.bf16.gmra.mxu0 %v1051
      %v1320 = vpop.f32.mrf.mxu0
      %v1321 = vadd.f32 %v1037, %v1320
      %v1322 = vpop.f32.mrf.mxu0
      %v1323 = vadd.f32 %v1042, %v1322
      %1324 = vdwg.mxu0
      %v1325 = vmul.f32 %v1321, %v1321
      %v1326 = vmul.f32 %v1323, %v1323
      %v1327 = vmul.f32 %v1321, %v1325
      %v1328 = vmul.f32 %v1323, %v1326
      %v1329 = vmul.f32 %v1327, 0.044715
      %v1330 = vmul.f32 %v1328, 0.044715
      %v1331 = vadd.f32 %v1321, %v1329
      %v1332 = vadd.f32 %v1323, %v1330
      %v1333 = vmul.f32 %v1331, 0.7978846
      %v1334 = vmul.f32 %v1332, 0.7978846
      %v1335 = vtanh.pop %v1333
      %v1336 = vtanh.pop %v1334
      %v1337 = vadd.f32 %v1335, 1.0
      %v1338 = vadd.f32 %v1336, 1.0
      %v1339 = vmul.f32 %v1337, 0.5
      %v1340 = vmul.f32 %v1338, 0.5
      %v1341 = vmul.f32 %v1321, %v1339
      %v1342 = vmul.f32 %v1323, %v1340
      %v1343 = vpack.c.bf16 %v1342, %v1341
      %1344 = vmatpush.bf16.msra.mxu0 0
      %1345 = vmatpush.bf16.msra.mxu0 0
      %1346 = vmatpush.bf16.msra.mxu0 0
      %1347 = vmatpush.bf16.msra.mxu0 0
      %1348 = vmatpush.bf16.msra.mxu0 0
      %1349 = vmatpush.bf16.msra.mxu0 0
      %1350 = vmatpush.bf16.msra.mxu0 0
      %1351 = vmatpush.bf16.msra.mxu0 %v1343
      %1352 = vmatmul.bf16.gmra.mxu0 %v1097
      %v1353 = vpop.f32.mrf.mxu0
      %v1354 = vadd.f32 %v1093, %v1353
      %v1355 = vpop.f32.mrf.mxu0
      %1356 = vdwg.mxu0
      %v1358 = vsel %vm1053, %v1032, 0
      %1360 = vmatpush.bf16.msra.mxu0 0
      %1361 = vmatpush.bf16.msra.mxu0 0
      %1362 = vmatpush.bf16.msra.mxu0 0
      %1363 = vmatpush.bf16.msra.mxu0 0
      %1364 = vmatpush.bf16.msra.mxu0 0
      %1365 = vmatpush.bf16.msra.mxu0 0
      %1366 = vmatpush.bf16.msra.mxu0 0
      %1367 = vmatpush.bf16.msra.mxu0 %v1358
      %1368 = vmatmul.bf16.gmra.mxu0 %v1051
      %v1369 = vpop.f32.mrf.mxu0
      %v1370 = vadd.f32 %v1037, %v1369
      %v1371 = vpop.f32.mrf.mxu0
      %v1372 = vadd.f32 %v1042, %v1371
      %1373 = vdwg.mxu0
      %v1374 = vmul.f32 %v1370, %v1370
      %v1375 = vmul.f32 %v1372, %v1372
      %v1376 = vmul.f32 %v1370, %v1374
      %v1377 = vmul.f32 %v1372, %v1375
      %v1378 = vmul.f32 %v1376, 0.044715
      %v1379 = vmul.f32 %v1377, 0.044715
      %v1380 = vadd.f32 %v1370, %v1378
      %v1381 = vadd.f32 %v1372, %v1379
      %v1382 = vmul.f32 %v1380, 0.7978846
      %v1383 = vmul.f32 %v1381, 0.7978846
      %v1384 = vtanh.pop %v1382
      %v1385 = vtanh.pop %v1383
      %v1386 = vadd.f32 %v1384, 1.0
      %v1387 = vadd.f32 %v1385, 1.0
      %v1388 = vmul.f32 %v1386, 0.5
      %v1389 = vmul.f32 %v1387, 0.5
      %v1390 = vmul.f32 %v1370, %v1388
      %v1391 = vmul.f32 %v1372, %v1389
      %v1392 = vpack.c.bf16 %v1391, %v1390
      %1393 = vmatpush.bf16.msra.mxu0 0
      %1394 = vmatpush.bf16.msra.mxu0 0
      %1395 = vmatpush.bf16.msra.mxu0 0
      %1396 = vmatpush.bf16.msra.mxu0 0
      %1397 = vmatpush.bf16.msra.mxu0 0
      %1398 = vmatpush.bf16.msra.mxu0 0
      %1399 = vmatpush.bf16.msra.mxu0 0
      %1400 = vmatpush.bf16.msra.mxu0 %v1392
      %1401 = vmatmul.bf16.gmra.mxu0 %v1097
      %v1402 = vpop.f32.mrf.mxu0
      %v1403 = vadd.f32 %v1093, %v1402
      %v1404 = vpop.f32.mrf.mxu0
      %1405 = vdwg.mxu0
      %v1407 = vsel %vm1053, %v1033, 0
      %1409 = vmatpush.bf16.msra.mxu0 0
      %1410 = vmatpush.bf16.msra.mxu0 0
      %1411 = vmatpush.bf16.msra.mxu0 0
      %1412 = vmatpush.bf16.msra.mxu0 0
      %1413 = vmatpush.bf16.msra.mxu0 0
      %1414 = vmatpush.bf16.msra.mxu0 0
      %1415 = vmatpush.bf16.msra.mxu0 0
      %1416 = vmatpush.bf16.msra.mxu0 %v1407
      %1417 = vmatmul.bf16.gmra.mxu0 %v1051
      %v1418 = vpop.f32.mrf.mxu0
      %v1419 = vadd.f32 %v1037, %v1418
      %v1420 = vpop.f32.mrf.mxu0
      %v1421 = vadd.f32 %v1042, %v1420
      %1422 = vdwg.mxu0
      %v1423 = vmul.f32 %v1419, %v1419
      %v1424 = vmul.f32 %v1421, %v1421
      %v1425 = vmul.f32 %v1419, %v1423
      %v1426 = vmul.f32 %v1421, %v1424
      %v1427 = vmul.f32 %v1425, 0.044715
      %v1428 = vmul.f32 %v1426, 0.044715
      %v1429 = vadd.f32 %v1419, %v1427
      %v1430 = vadd.f32 %v1421, %v1428
      %v1431 = vmul.f32 %v1429, 0.7978846
      %v1432 = vmul.f32 %v1430, 0.7978846
      %v1433 = vtanh.pop %v1431
      %v1434 = vtanh.pop %v1432
      %v1435 = vadd.f32 %v1433, 1.0
      %v1436 = vadd.f32 %v1434, 1.0
      %v1437 = vmul.f32 %v1435, 0.5
      %v1438 = vmul.f32 %v1436, 0.5
      %v1439 = vmul.f32 %v1419, %v1437
      %v1440 = vmul.f32 %v1421, %v1438
      %v1441 = vpack.c.bf16 %v1440, %v1439
      %1442 = vmatpush.bf16.msra.mxu0 0
      %1443 = vmatpush.bf16.msra.mxu0 0
      %1444 = vmatpush.bf16.msra.mxu0 0
      %1445 = vmatpush.bf16.msra.mxu0 0
      %1446 = vmatpush.bf16.msra.mxu0 0
      %1447 = vmatpush.bf16.msra.mxu0 0
      %1448 = vmatpush.bf16.msra.mxu0 0
      %1449 = vmatpush.bf16.msra.mxu0 %v1441
      %1450 = vmatmul.bf16.gmra.mxu0 %v1097
      %v1451 = vpop.f32.mrf.mxu0
      %v1452 = vadd.f32 %v1093, %v1451
      %v1453 = vpop.f32.mrf.mxu0
      %1454 = vdwg.mxu0
      %v1455 = vadd.f32 %v788, %v1109
      %v1456 = vadd.f32 %v789, %v1158
      %v1457 = vadd.f32 %v790, %v1207
      %v1458 = vadd.f32 %v791, %v1256
      %v1459 = vadd.f32 %v792, %v1305
      %v1460 = vadd.f32 %v793, %v1354
      %v1461 = vadd.f32 %v794, %v1403
      %v1462 = vadd.f32 %v795, %v1452
      %v1463 = vsel %vm820, %v1455, 0.0
      %1464 = vadd.xlane.f32.xlu0 %v1463
      %v1465 = vpop.xlane.xlu0 %1464
      %v1466 = vsel %vm820, %v1456, 0.0
      %1467 = vadd.xlane.f32.xlu0 %v1466
      %v1468 = vpop.xlane.xlu0 %1467
      %v1469 = vsel %vm820, %v1457, 0.0
      %1470 = vadd.xlane.f32.xlu0 %v1469
      %v1471 = vpop.xlane.xlu0 %1470
      %v1472 = vsel %vm820, %v1458, 0.0
      %1473 = vadd.xlane.f32.xlu0 %v1472
      %v1474 = vpop.xlane.xlu0 %1473
      %v1475 = vsel %vm820, %v1459, 0.0
      %1476 = vadd.xlane.f32.xlu0 %v1475
      %v1477 = vpop.xlane.xlu0 %1476
      %v1478 = vsel %vm820, %v1460, 0.0
      %1479 = vadd.xlane.f32.xlu0 %v1478
      %v1480 = vpop.xlane.xlu0 %1479
      %v1481 = vsel %vm820, %v1461, 0.0
      %1482 = vadd.xlane.f32.xlu0 %v1481
      %v1483 = vpop.xlane.xlu0 %1482
      %v1484 = vsel %vm820, %v1462, 0.0
      %1485 = vadd.xlane.f32.xlu0 %v1484
      %v1486 = vpop.xlane.xlu0 %1485
      %v1487 = vmul.f32 %v1465, %v851
      %v1488 = vmul.f32 %v1468, %v851
      %v1489 = vmul.f32 %v1471, %v851
      %v1490 = vmul.f32 %v1474, %v851
      %v1491 = vmul.f32 %v1477, %v851
      %v1492 = vmul.f32 %v1480, %v851
      %v1493 = vmul.f32 %v1483, %v851
      %v1494 = vmul.f32 %v1486, %v851
      %v1495 = vsub.f32 %v1455, %v1487
      %v1496 = vsub.f32 %v1456, %v1488
      %v1497 = vsub.f32 %v1457, %v1489
      %v1498 = vsub.f32 %v1458, %v1490
      %v1499 = vsub.f32 %v1459, %v1491
      %v1500 = vsub.f32 %v1460, %v1492
      %v1501 = vsub.f32 %v1461, %v1493
      %v1502 = vsub.f32 %v1462, %v1494
      %v1503 = vmul.f32 %v1495, %v1495
      %v1504 = vmul.f32 %v1496, %v1496
      %v1505 = vmul.f32 %v1497, %v1497
      %v1506 = vmul.f32 %v1498, %v1498
      %v1507 = vmul.f32 %v1499, %v1499
      %v1508 = vmul.f32 %v1500, %v1500
      %v1509 = vmul.f32 %v1501, %v1501
      %v1510 = vmul.f32 %v1502, %v1502
      %v1511 = vsel %vm820, %v1503, 0.0
      %1512 = vadd.xlane.f32.xlu0 %v1511
      %v1513 = vpop.xlane.xlu0 %1512
      %v1514 = vsel %vm820, %v1504, 0.0
      %1515 = vadd.xlane.f32.xlu0 %v1514
      %v1516 = vpop.xlane.xlu0 %1515
      %v1517 = vsel %vm820, %v1505, 0.0
      %1518 = vadd.xlane.f32.xlu0 %v1517
      %v1519 = vpop.xlane.xlu0 %1518
      %v1520 = vsel %vm820, %v1506, 0.0
      %1521 = vadd.xlane.f32.xlu0 %v1520
      %v1522 = vpop.xlane.xlu0 %1521
      %v1523 = vsel %vm820, %v1507, 0.0
      %1524 = vadd.xlane.f32.xlu0 %v1523
      %v1525 = vpop.xlane.xlu0 %1524
      %v1526 = vsel %vm820, %v1508, 0.0
      %1527 = vadd.xlane.f32.xlu0 %v1526
      %v1528 = vpop.xlane.xlu0 %1527
      %v1529 = vsel %vm820, %v1509, 0.0
      %1530 = vadd.xlane.f32.xlu0 %v1529
      %v1531 = vpop.xlane.xlu0 %1530
      %v1532 = vsel %vm820, %v1510, 0.0
      %1533 = vadd.xlane.f32.xlu0 %v1532
      %v1534 = vpop.xlane.xlu0 %1533
      %v1535 = vmul.f32 %v1513, %v851
      %v1536 = vmul.f32 %v1516, %v851
      %v1537 = vmul.f32 %v1519, %v851
      %v1538 = vmul.f32 %v1522, %v851
      %v1539 = vmul.f32 %v1525, %v851
      %v1540 = vmul.f32 %v1528, %v851
      %v1541 = vmul.f32 %v1531, %v851
      %v1542 = vmul.f32 %v1534, %v851
      %v1543 = vadd.f32 %v1535, 1e-05
      %v1544 = vadd.f32 %v1536, 1e-05
      %v1545 = vadd.f32 %v1537, 1e-05
      %v1546 = vadd.f32 %v1538, 1e-05
      %v1547 = vadd.f32 %v1539, 1e-05
      %v1548 = vadd.f32 %v1540, 1e-05
      %v1549 = vadd.f32 %v1541, 1e-05
      %v1550 = vadd.f32 %v1542, 1e-05
      %v1551 = vrsqrt.pop %v1543
      %v1552 = vmul.f32 %v1551, %v1543
      %v1553 = vmul.f32 %v1552, %v1551
      %v1554 = vmul.f32 0.5, %v1553
      %v1555 = vsub.f32 1.5, %v1554
      %v1556 = vmul.f32 %v1551, %v1555
      %vm1557 = vweird.f32 %v1543
      %vm1558 = vweird.f32 %v1551
      %vm1559 = vmor %vm1557, %vm1558
      %v1560 = vsel %vm1559, %v1551, %v1556
      %v1561 = vrsqrt.pop %v1544
      %v1562 = vmul.f32 %v1561, %v1544
      %v1563 = vmul.f32 %v1562, %v1561
      %v1564 = vmul.f32 0.5, %v1563
      %v1565 = vsub.f32 1.5, %v1564
      %v1566 = vmul.f32 %v1561, %v1565
      %vm1567 = vweird.f32 %v1544
      %vm1568 = vweird.f32 %v1561
      %vm1569 = vmor %vm1567, %vm1568
      %v1570 = vsel %vm1569, %v1561, %v1566
      %v1571 = vrsqrt.pop %v1545
      %v1572 = vmul.f32 %v1571, %v1545
      %v1573 = vmul.f32 %v1572, %v1571
      %v1574 = vmul.f32 0.5, %v1573
      %v1575 = vsub.f32 1.5, %v1574
      %v1576 = vmul.f32 %v1571, %v1575
      %vm1577 = vweird.f32 %v1545
      %vm1578 = vweird.f32 %v1571
      %vm1579 = vmor %vm1577, %vm1578
      %v1580 = vsel %vm1579, %v1571, %v1576
      %v1581 = vrsqrt.pop %v1546
      %v1582 = vmul.f32 %v1581, %v1546
      %v1583 = vmul.f32 %v1582, %v1581
      %v1584 = vmul.f32 0.5, %v1583
      %v1585 = vsub.f32 1.5, %v1584
      %v1586 = vmul.f32 %v1581, %v1585
      %vm1587 = vweird.f32 %v1546
      %vm1588 = vweird.f32 %v1581
      %vm1589 = vmor %vm1587, %vm1588
      %v1590 = vsel %vm1589, %v1581, %v1586
      %v1591 = vrsqrt.pop %v1547
      %v1592 = vmul.f32 %v1591, %v1547
      %v1593 = vmul.f32 %v1592, %v1591
      %v1594 = vmul.f32 0.5, %v1593
      %v1595 = vsub.f32 1.5, %v1594
      %v1596 = vmul.f32 %v1591, %v1595
      %vm1597 = vweird.f32 %v1547
      %vm1598 = vweird.f32 %v1591
      %vm1599 = vmor %vm1597, %vm1598
      %v1600 = vsel %vm1599, %v1591, %v1596
      %v1601 = vrsqrt.pop %v1548
      %v1602 = vmul.f32 %v1601, %v1548
      %v1603 = vmul.f32 %v1602, %v1601
      %v1604 = vmul.f32 0.5, %v1603
      %v1605 = vsub.f32 1.5, %v1604
      %v1606 = vmul.f32 %v1601, %v1605
      %vm1607 = vweird.f32 %v1548
      %vm1608 = vweird.f32 %v1601
      %vm1609 = vmor %vm1607, %vm1608
      %v1610 = vsel %vm1609, %v1601, %v1606
      %v1611 = vrsqrt.pop %v1549
      %v1612 = vmul.f32 %v1611, %v1549
      %v1613 = vmul.f32 %v1612, %v1611
      %v1614 = vmul.f32 0.5, %v1613
      %v1615 = vsub.f32 1.5, %v1614
      %v1616 = vmul.f32 %v1611, %v1615
      %vm1617 = vweird.f32 %v1549
      %vm1618 = vweird.f32 %v1611
      %vm1619 = vmor %vm1617, %vm1618
      %v1620 = vsel %vm1619, %v1611, %v1616
      %v1621 = vrsqrt.pop %v1550
      %v1622 = vmul.f32 %v1621, %v1550
      %v1623 = vmul.f32 %v1622, %v1621
      %v1624 = vmul.f32 0.5, %v1623
      %v1625 = vsub.f32 1.5, %v1624
      %v1626 = vmul.f32 %v1621, %v1625
      %vm1627 = vweird.f32 %v1550
      %vm1628 = vweird.f32 %v1621
      %vm1629 = vmor %vm1627, %vm1628
      %v1630 = vsel %vm1629, %v1621, %v1626
      %v1631 = vmul.f32 %v1495, %v1560
      %v1632 = vmul.f32 %v1496, %v1570
      %v1633 = vmul.f32 %v1497, %v1580
      %v1634 = vmul.f32 %v1498, %v1590
      %v1635 = vmul.f32 %v1499, %v1600
      %v1636 = vmul.f32 %v1500, %v1610
      %v1637 = vmul.f32 %v1501, %v1620
      %v1638 = vmul.f32 %v1502, %v1630
      %v1640 = vperm.slane %v798, 0
      %v1642 = vmul.f32 %v1631, %v1640
      %v1643 = vmul.f32 %v1632, %v1640
      %v1644 = vmul.f32 %v1633, %v1640
      %v1645 = vmul.f32 %v1634, %v1640
      %v1646 = vmul.f32 %v1635, %v1640
      %v1647 = vmul.f32 %v1636, %v1640
      %v1648 = vmul.f32 %v1637, %v1640
      %v1649 = vmul.f32 %v1638, %v1640
      %v1651 = vperm.slane %v799, 0
      %v1653 = vadd.f32 %v1642, %v1651
      %v1654 = vadd.f32 %v1643, %v1651
      %v1655 = vadd.f32 %v1644, %v1651
      %v1656 = vadd.f32 %v1645, %v1651
      %v1657 = vadd.f32 %v1646, %v1651
      %v1658 = vadd.f32 %v1647, %v1651
      %v1659 = vadd.f32 %v1648, %v1651
      %v1660 = vadd.f32 %v1649, %v1651
      %v1661 = vpack.c.bf16 %v1654, %v1653
      %v1662 = vpack.c.bf16 %v1656, %v1655
      %v1663 = vpack.c.bf16 %v1658, %v1657
      %v1664 = vpack.c.bf16 %v1660, %v1659
      %v1666 = vperm.slane %v810, 0
      %v1672 = vunpack.c.l.b16 %v806
      %v1673 = vunpack.c.l.b16 %v807
      %v1674 = vunpack.c.l.b16 %v808
      %v1675 = vunpack.c.l.b16 %v809
      %v1676 = vpack.c.b16 %v1673, %v1672
      %v1677 = vpack.c.b16 %v1675, %v1674
      %v1681 = vsel %vm820, %v1661, 0
      %v1684 = vsel %vm820, %v1662, 0
      %v1687 = vsel %vm820, %v1663, 0
      %v1690 = vsel %vm820, %v1664, 0
      %1692 = vmatpush.bf16.msra.mxu0 0
      %1693 = vmatpush.bf16.msra.mxu0 0
      %1694 = vmatpush.bf16.msra.mxu0 0
      %1695 = vmatpush.bf16.msra.mxu0 0
      %1696 = vmatpush.bf16.msra.mxu0 0
      %1697 = vmatpush.bf16.msra.mxu0 0
      %1698 = vmatpush.bf16.msra.mxu0 %v1677
      %1699 = vmatpush.bf16.msra.mxu0 %v1676
      %1700 = vmatmul.bf16.gmra.mxu0 %v1681
      %v1701 = vpop.f32.mrf.mxu0
      %v1702 = vadd.f32 %v1666, %v1701
      %v1703 = vpop.f32.mrf.mxu0
      %v1704 = vadd.f32 %v1666, %v1703
      %1705 = vmatmul.bf16.gmra.mxu0 %v1684
      %v1706 = vpop.f32.mrf.mxu0
      %v1707 = vadd.f32 %v1666, %v1706
      %v1708 = vpop.f32.mrf.mxu0
      %v1709 = vadd.f32 %v1666, %v1708
      %1710 = vmatmul.bf16.gmra.mxu0 %v1687
      %v1711 = vpop.f32.mrf.mxu0
      %v1712 = vadd.f32 %v1666, %v1711
      %v1713 = vpop.f32.mrf.mxu0
      %v1714 = vadd.f32 %v1666, %v1713
      %1715 = vmatmul.bf16.gmra.mxu0 %v1690
      %v1716 = vpop.f32.mrf.mxu0
      %v1717 = vadd.f32 %v1666, %v1716
      %v1718 = vpop.f32.mrf.mxu0
      %v1719 = vadd.f32 %v1666, %v1718
      %1720 = vdwg.mxu0
      %v1721 = vmul.f32 %v1702, %v1702
      %v1722 = vmul.f32 %v1704, %v1704
      %v1723 = vmul.f32 %v1707, %v1707
      %v1724 = vmul.f32 %v1709, %v1709
      %v1725 = vmul.f32 %v1712, %v1712
      %v1726 = vmul.f32 %v1714, %v1714
      %v1727 = vmul.f32 %v1717, %v1717
      %v1728 = vmul.f32 %v1719, %v1719
      %v1729 = vmul.f32 %v1702, %v1721
      %v1730 = vmul.f32 %v1704, %v1722
      %v1731 = vmul.f32 %v1707, %v1723
      %v1732 = vmul.f32 %v1709, %v1724
      %v1733 = vmul.f32 %v1712, %v1725
      %v1734 = vmul.f32 %v1714, %v1726
      %v1735 = vmul.f32 %v1717, %v1727
      %v1736 = vmul.f32 %v1719, %v1728
      %v1737 = vmul.f32 %v1729, 0.044715
      %v1738 = vmul.f32 %v1730, 0.044715
      %v1739 = vmul.f32 %v1731, 0.044715
      %v1740 = vmul.f32 %v1732, 0.044715
      %v1741 = vmul.f32 %v1733, 0.044715
      %v1742 = vmul.f32 %v1734, 0.044715
      %v1743 = vmul.f32 %v1735, 0.044715
      %v1744 = vmul.f32 %v1736, 0.044715
      %v1745 = vadd.f32 %v1702, %v1737
      %v1746 = vadd.f32 %v1704, %v1738
      %v1747 = vadd.f32 %v1707, %v1739
      %v1748 = vadd.f32 %v1709, %v1740
      %v1749 = vadd.f32 %v1712, %v1741
      %v1750 = vadd.f32 %v1714, %v1742
      %v1751 = vadd.f32 %v1717, %v1743
      %v1752 = vadd.f32 %v1719, %v1744
      %v1753 = vmul.f32 %v1745, 0.7978846
      %v1754 = vmul.f32 %v1746, 0.7978846
      %v1755 = vmul.f32 %v1747, 0.7978846
      %v1756 = vmul.f32 %v1748, 0.7978846
      %v1757 = vmul.f32 %v1749, 0.7978846
      %v1758 = vmul.f32 %v1750, 0.7978846
      %v1759 = vmul.f32 %v1751, 0.7978846
      %v1760 = vmul.f32 %v1752, 0.7978846
      %v1761 = vtanh.pop %v1753
      %v1762 = vtanh.pop %v1754
      %v1763 = vtanh.pop %v1755
      %v1764 = vtanh.pop %v1756
      %v1765 = vtanh.pop %v1757
      %v1766 = vtanh.pop %v1758
      %v1767 = vtanh.pop %v1759
      %v1768 = vtanh.pop %v1760
      %v1769 = vadd.f32 %v1761, 1.0
      %v1770 = vadd.f32 %v1762, 1.0
      %v1771 = vadd.f32 %v1763, 1.0
      %v1772 = vadd.f32 %v1764, 1.0
      %v1773 = vadd.f32 %v1765, 1.0
      %v1774 = vadd.f32 %v1766, 1.0
      %v1775 = vadd.f32 %v1767, 1.0
      %v1776 = vadd.f32 %v1768, 1.0
      %v1777 = vmul.f32 %v1769, 0.5
      %v1778 = vmul.f32 %v1770, 0.5
      %v1779 = vmul.f32 %v1771, 0.5
      %v1780 = vmul.f32 %v1772, 0.5
      %v1781 = vmul.f32 %v1773, 0.5
      %v1782 = vmul.f32 %v1774, 0.5
      %v1783 = vmul.f32 %v1775, 0.5
      %v1784 = vmul.f32 %v1776, 0.5
      %v1785 = vmul.f32 %v1702, %v1777
      %v1786 = vmul.f32 %v1704, %v1778
      %v1787 = vmul.f32 %v1707, %v1779
      %v1788 = vmul.f32 %v1709, %v1780
      %v1789 = vmul.f32 %v1712, %v1781
      %v1790 = vmul.f32 %v1714, %v1782
      %v1791 = vmul.f32 %v1717, %v1783
      %v1792 = vmul.f32 %v1719, %v1784
      %v1793 = vpack.c.bf16 %v1786, %v1785
      %v1794 = vpack.c.bf16 %v1788, %v1787
      %v1795 = vpack.c.bf16 %v1790, %v1789
      %v1796 = vpack.c.bf16 %v1792, %v1791
      %v1798 = vperm.slane %v819, 0
      %v1808 = vunpack.c.l.b16 %v811
      %v1809 = vunpack.c.l.b16 %v812
      %v1810 = vunpack.c.l.b16 %v813
      %v1811 = vunpack.c.l.b16 %v814
      %v1812 = vunpack.c.l.b16 %v815
      %v1813 = vunpack.c.l.b16 %v816
      %v1814 = vunpack.c.l.b16 %v817
      %v1815 = vunpack.c.l.b16 %v818
      %v1816 = vpack.c.b16 %v1809, %v1808
      %v1817 = vpack.c.b16 %v1811, %v1810
      %v1818 = vpack.c.b16 %v1813, %v1812
      %v1819 = vpack.c.b16 %v1815, %v1814
      %vm1824 = vcmask 523264
      %v1826 = vsel %vm1824, %v1793, 0
      %v1829 = vsel %vm1824, %v1794, 0
      %v1832 = vsel %vm1824, %v1795, 0
      %v1835 = vsel %vm1824, %v1796, 0
      %1837 = vmatpush.bf16.msra.mxu0 0
      %1838 = vmatpush.bf16.msra.mxu0 0
      %1839 = vmatpush.bf16.msra.mxu0 0
      %1840 = vmatpush.bf16.msra.mxu0 0
      %1841 = vmatpush.bf16.msra.mxu0 %v1819
      %1842 = vmatpush.bf16.msra.mxu0 %v1818
      %1843 = vmatpush.bf16.msra.mxu0 %v1817
      %1844 = vmatpush.bf16.msra.mxu0 %v1816
      %1845 = vmatmul.bf16.gmra.mxu0 %v1826
      %v1846 = vpop.f32.mrf.mxu0
      %v1847 = vadd.f32 %v1798, %v1846
      %v1848 = vpop.f32.mrf.mxu0
      %v1849 = vadd.f32 %v1798, %v1848
      %1850 = vmatmul.bf16.gmra.mxu0 %v1829
      %v1851 = vpop.f32.mrf.mxu0
      %v1852 = vadd.f32 %v1798, %v1851
      %v1853 = vpop.f32.mrf.mxu0
      %v1854 = vadd.f32 %v1798, %v1853
      %1855 = vmatmul.bf16.gmra.mxu0 %v1832
      %v1856 = vpop.f32.mrf.mxu0
      %v1857 = vadd.f32 %v1798, %v1856
      %v1858 = vpop.f32.mrf.mxu0
      %v1859 = vadd.f32 %v1798, %v1858
      %1860 = vmatmul.bf16.gmra.mxu0 %v1835
      %v1861 = vpop.f32.mrf.mxu0
      %v1862 = vadd.f32 %v1798, %v1861
      %v1863 = vpop.f32.mrf.mxu0
      %v1864 = vadd.f32 %v1798, %v1863
      %1865 = vdwg.mxu0
      %v1866 = vadd.f32 %v1455, %v1847
      %v1867 = vadd.f32 %v1456, %v1849
      %v1868 = vadd.f32 %v1457, %v1852
      %v1869 = vadd.f32 %v1458, %v1854
      %v1870 = vadd.f32 %v1459, %v1857
      %v1871 = vadd.f32 %v1460, %v1859
      %v1872 = vadd.f32 %v1461, %v1862
      %v1873 = vadd.f32 %v1462, %v1864
      %1874 = vst.msk [vmem:[%s706] sm:$0xff] %vm820, %v1866
      %1875 = vst.msk [vmem:[%s706 + $0x8] sm:$0xff] %vm820, %v1867
      %1876 = vst.msk [vmem:[%s706 + $0x10] sm:$0xff] %vm820, %v1868
      %1877 = vst.msk [vmem:[%s706 + $0x18] sm:$0xff] %vm820, %v1869
      %1878 = vst.msk [vmem:[%s706 + $0x20] sm:$0xff] %vm820, %v1870
      %1879 = vst.msk [vmem:[%s706 + $0x28] sm:$0xff] %vm820, %v1871
      %1880 = vst.msk [vmem:[%s706 + $0x30] sm:$0xff] %vm820, %v1872
      %1881 = vst.msk [vmem:[%s706 + $0x38] sm:$0xff] %vm820, %v1873
      %s1882 = smul.u32 8, %s30
      %p1883 = scmp.lt.s32.totalorder %s1882, 7
      %s1884 = scalar_select %p1883, %s1882, 7
      %s1885 = smul.addr %s1884, 8
      %s1886 = scalar_lea.vmem %s15, %s1885
      // Predicated region
      $region85: #{tpu_custom_call.1} parent=79 // pred_check
        %p1887 = pneg %p436
      $region86: #{tpu_custom_call.1} parent=79 // pred_check_branch
        %1889 = sbr.rel (%p1887) target = $region88
      $region87: #{tpu_custom_call.1} parent=79 // pred_region
        %s1890 = smul.u32 8, %s30
      $region88: #{tpu_custom_call.1} parent=79 // pred_fallthru
        _
      // Predicated region
      $region89: #{tpu_custom_call.1} parent=79 // pred_check
        %p1891 = pneg %p436
      $region90: #{tpu_custom_call.1} parent=79 // pred_check_branch
        %1893 = sbr.rel (%p1891) target = $region92
      $region91: #{tpu_custom_call.1} parent=79 // pred_region
        %s1894 = smul.u32 8, %s30
        %p1895 = scmp.lt.s32.totalorder %s1894, 7
        %s1896 = scalar_select %p1895, %s1894, 7
        %s1897 = smul.addr %s1896, 8
        %s1898 = scalar_lea.vmem %s15, %s1897
      $region92: #{tpu_custom_call.1} parent=79 // pred_fallthru
        _
    $region80: #{tpu_custom_call.1} parent=5 // pred_fallthru
      _
    %p1899 = scmp.le.s32.totalorder 2, %s21
    // Predicated region
    $region93: #{tpu_custom_call.1} parent=5 // pred_check
      %p1900 = pneg %p1899
    $region94: #{tpu_custom_call.1} parent=5 // pred_check_branch
      %1902 = sbr.rel (%p1900) target = $region96
    $region95: #{tpu_custom_call.1} parent=5 // pred_region
      %s1903 = ssub.s32 %s21, 2
    $region96: #{tpu_custom_call.1} parent=5 // pred_fallthru
      _
  $region6: #{tpu_custom_call.1} parent=0 // loop_footer
    %s25 = sadd.s32 1, %s21
  $region7: #{tpu_custom_call.1} parent=0 // loop_footer_branch
    %20 = sbr.rel target = $region3
  $region8: #{tpu_custom_call.1} parent=0 // loop_exit
    _

</llo_original>
